<compile_context>
chip_gen: v6e
topology: v6e:2x2x1
jax: 0.10.0
libtpu: 0.0.40
codegen_flags: <defaults>
</compile_context>

<pallas_src>
import functools

import jax
import jax.numpy as jnp
from jax.experimental import pallas as pl
from jax.experimental.pallas import tpu as pltpu

_PAD = 8  # sublane-tile-aligned column offset of the image inside the scratch


# ----------------------------------------------------------------------------
# Pallas kernel: fused Sobel -> |grad| -> mean over channels (NHWC layout)
# ----------------------------------------------------------------------------
def _sobel_mag_mean_kernel(x_ref, xt_ref, xb_ref, o_ref, xp_ref):
    # x_ref : (TB, TH, W, C)        row strip of the input (any float dtype)
    # xt_ref: (TB, 1, W, C)         row just above the strip (ignored at h==0)
    # xb_ref: (TB, 1, W, C)         row just below the strip (ignored at h==last)
    # o_ref : (TB, TH, W) float32   mean_c sqrt(gx^2 + gy^2), lane-dense
    # xp_ref: (TB, TH+2, W+16, C)   halo scratch (bf16 or f32); only the ring
    #                               plus the interior written below is read.
    tb, th, w, c = x_ref.shape
    sdt = xp_ref.dtype
    lo = _PAD - 1            # scratch column of image column j-1 (zero at j=0)
    hi = _PAD + w + 1        # exclusive end: image column j+1 (zero at j=W-1)

    # --- halo ring only (no full-scratch zero fill) --------------------------
    # Zero one aligned 8-column block on each side of the image.  The right
    # block may overlap the last image columns; those get overwritten by the
    # data stores below, so only the true halo columns (j=-1 and j=W) stay 0.
    zblk = jnp.zeros((tb, th + 2, _PAD, c), sdt)
    rstart = ((_PAD + w) // _PAD) * _PAD     # aligned block containing col j=W
    xp_ref[:, :, 0:_PAD, :] = zblk
    xp_ref[:, :, rstart:rstart + _PAD, :] = zblk

    # Top / bottom halo rows: the neighbouring strip's edge row, or zero at the
    # image border (zero first, conditionally overwrite with real data).
    zrow = jnp.zeros((tb, 1, w, c), sdt)
    h_id = pl.program_id(1)

    xp_ref[:, 0:1, _PAD:_PAD + w, :] = zrow

    @pl.when(h_id > 0)
    def _():
        xp_ref[:, 0:1, _PAD:_PAD + w, :] = xt_ref[...].astype(sdt)

    xp_ref[:, th + 1:th + 2, _PAD:_PAD + w, :] = zrow

    @pl.when(h_id < pl.num_programs(1) - 1)
    def _():
        xp_ref[:, th + 1:th + 2, _PAD:_PAD + w, :] = xb_ref[...].astype(sdt)

    # Interior rows (tile-aligned column offset _PAD -> aligned store).
    xp_ref[:, 1:th + 1, _PAD:_PAD + w, :] = x_ref[...].astype(sdt)

    # --- separable Sobel stencil ---------------------------------------------
    top = xp_ref[:, 0:th,     lo:hi, :]   # X[i-1, j-1 .. j+1]
    mid = xp_ref[:, 1:th + 1, lo:hi, :]   # X[i  , j-1 .. j+1]
    bot = xp_ref[:, 2:th + 2, lo:hi, :]   # X[i+1, j-1 .. j+1]

    v = top + 2.0 * mid + bot             # vertical [1,2,1]  pass (for grad_x)
    d = bot - top                         # vertical [-1,0,1] pass (for grad_y)
    gx = (v[:, :, 2:w + 2, :] - v[:, :, 0:w, :]).astype(jnp.float32)
    gy = (d[:, :, 0:w, :] + 2.0 * d[:, :, 1:w + 1, :]
          + d[:, :, 2:w + 2, :]).astype(jnp.float32)

    mag = jnp.sqrt(gx * gx + gy * gy)     # (TB, TH, W, C), f32
    # Channel mean, stored lane-dense (no trailing singleton dim).
    o_ref[...] = jnp.mean(mag, axis=-1).astype(o_ref.dtype)


# ----------------------------------------------------------------------------
# Generation-aware sizing
# ----------------------------------------------------------------------------
@functools.lru_cache(maxsize=1)
def _chip_profile():
    """VMEM budget / grid sizing knobs per TPU generation (safe fallbacks)."""
    kind = ""
    try:
        kind = jax.devices()[0].device_kind.lower()
    except Exception:
        pass
    try:
        vmem_phys = int(pltpu.get_tpu_info().vmem_capacity_bytes)
    except Exception:
        vmem_phys = (64 if "v7" in kind else 128) * 1024 * 1024
    small_vmem = vmem_phys <= 64 * 1024 * 1024       # v7x-class parts
    return {
        "budget": (16 if small_vmem else 40) * 1024 * 1024,   # tile-chooser target
        "vmem_limit": (32 if small_vmem else 64) * 1024 * 1024,
        # >=4 parallel steps for 2-TensorCore chips; >=2 elsewhere (pipelining)
        "min_steps": 4 if (small_vmem or "v7" in kind) else 2,
        # bf16 VALU exists on v6e / v7x only; keep f32 math elsewhere (v5e/v4)
        "bf16_ok": ("v6" in kind) or ("v7" in kind),
    }


def _choose_tiles(b, h, w, c, in_dtype, scratch_dtype, budget_bytes, min_steps):
    """Pick (TB, TH): images and image-rows per grid step.  Prefer tiles that
    (a) fit the VMEM budget, (b) give >= min_steps grid steps, (c) are as large
    as possible, splitting the batch before splitting H (less halo overhead)."""
    in_sz = jnp.dtype(in_dtype).itemsize
    sc_sz = jnp.dtype(scratch_dtype).itemsize

    def _round_up(n, m):
        return ((n + m - 1) // m) * m

    def _vmem_bytes(tb, th):
        inp = 2 * tb * th * w * c * in_sz             # strip (double-buffered)
        halo = 2 * 2 * tb * w * c * in_sz             # 2x 1-row halos (double-buffered)
        scr = tb * (th + 2) * (w + 16) * c * sc_sz    # halo scratch
        tmp = 8 * tb * th * (w + 2) * c * 4           # ~8 live f32 stencil slabs
        outp = 2 * tb * _round_up(th, 8) * _round_up(w, 128) * 4
        return inp + halo + scr + tmp + outp

    # TH must divide H and be a multiple of 8 (or equal H) so the lane-dense
    # output block (TB, TH, W) keeps a legal sublane-tiled shape.
    th_cands = [d for d in range(h, 0, -1) if h % d == 0 and (d == h or d % 8 == 0)]
    tb_cands = [d for d in range(b, 0, -1) if b % d == 0]

    best_key, best = None, None
    for th in th_cands:
        for tb in tb_cands:
            if _vmem_bytes(tb, th) > budget_bytes:
                continue
            steps = (b // tb) * (h // th)
            meets = steps >= min_steps
            key = (0 if meets else 1, steps if meets else -steps, -th, -tb)
            if best_key is None or key < best_key:
                best_key, best = key, (tb, th)
    if best is None:                         # nothing fits: smallest legal tile
        return 1, th_cands[-1]
    return best


def sobel_grad_magnitude_mean(x):
    """x: (B, H, W, C) NHWC.  Returns mean_c sqrt(gx^2+gy^2) as (B, H, W, 1) f32."""
    B, H, W, C = x.shape
    prof = _chip_profile()
    sdt = (jnp.bfloat16
           if (x.dtype == jnp.bfloat16 and prof["bf16_ok"]) else jnp.float32)
    TB, TH = _choose_tiles(B, H, W, C, x.dtype, sdt,
                           prof["budget"], prof["min_steps"])

    def strip_map(b, hh):
        return (b, hh, 0, 0)

    def top_map(b, hh):    # row above the strip; clamped (zero-masked in kernel)
        return (b, jnp.maximum(hh * TH - 1, 0), 0, 0)

    def bot_map(b, hh):    # row below the strip; clamped (zero-masked in kernel)
        return (b, jnp.minimum(hh * TH + TH, H - 1), 0, 0)

    out = pl.pallas_call(
        _sobel_mag_mean_kernel,
        out_shape=jax.ShapeDtypeStruct((B, H, W), jnp.float32),
        grid=(B // TB, H // TH),
        in_specs=[
            pl.BlockSpec((TB, TH, W, C), strip_map),
            pl.BlockSpec((TB, 1, W, C), top_map),
            pl.BlockSpec((TB, 1, W, C), bot_map),
        ],
        out_specs=pl.BlockSpec((TB, TH, W), lambda b, hh: (b, hh, 0)),
        scratch_shapes=[pltpu.VMEM((TB, TH + 2, W + 16, C), sdt)],
        compiler_params=pltpu.CompilerParams(
            dimension_semantics=("parallel", "parallel"),
            vmem_limit_bytes=prof["vmem_limit"],
        ),
    )(x, x, x)
    return out[..., None]   # (B, H, W, 1)


# ----------------------------------------------------------------------------
# Plain-JAX glue for the rest of BSANForSwinTransformer.forward
# TODO(synk): the 3x3/1x1 convs, BatchNorm, LayerNorm and the SE MLP are dense
# conv/matmul ops that XLA already handles well; only the memory-bound Sobel
# stencil above is a hand-written Pallas kernel.
# ----------------------------------------------------------------------------
def _layer_norm(x, g, b, eps=1e-5):
    mu = jnp.mean(x, axis=-1, keepdims=True)
    var = jnp.var(x, axis=-1, keepdims=True)
    return (x - mu) * jax.lax.rsqrt(var + eps) * g + b


def _batch_norm(x, g, b, eps=1e-5):
    # Training-mode BatchNorm (batch statistics), matching a freshly built
    # torch module called in its default mode.
    mu = jnp.mean(x, axis=(0, 1, 2), keepdims=True)
    var = jnp.var(x, axis=(0, 1, 2), keepdims=True)
    return (x - mu) * jax.lax.rsqrt(var + eps) * g + b


def init_params(key, dim, reduction=16):
    k0, k1, k2, k3 = jax.random.split(key, 4)
    hidden = max(1, dim // reduction)
    return {
        "ln_gamma": jnp.ones((dim,), jnp.float32),
        "ln_beta": jnp.zeros((dim,), jnp.float32),
        # gradient_extraction: Conv2d(1, 64, 3, padding=1) + BN(64) + ReLU
        "w_ext": 0.1 * jax.random.normal(k0, (3, 3, 1, 64), jnp.float32),   # HWIO
        "b_ext": jnp.zeros((64,), jnp.float32),
        "bn1_gamma": jnp.ones((64,), jnp.float32),
        "bn1_beta": jnp.zeros((64,), jnp.float32),
        # gradient_fusion: Conv2d(64, dim, 1) + BN(dim)
        "w_fus": 0.1 * jax.random.normal(k1, (1, 1, 64, dim), jnp.float32),
        "b_fus": jnp.zeros((dim,), jnp.float32),
        "bn2_gamma": jnp.ones((dim,), jnp.float32),
        "bn2_beta": jnp.zeros((dim,), jnp.float32),
        # Squeeze-Excitation MLP (bias-free)
        "w_se1": 0.1 * jax.random.normal(k2, (dim, hidden), jnp.float32),
        "w_se2": 0.1 * jax.random.normal(k3, (hidden, dim), jnp.float32),
    }


def bsan_for_swin_forward(params, x, input_resolution):
    """x: (B, H*W, C) -> (B, H*W, C), channels-last throughout."""
    H, W = input_resolution
    B, L, C = x.shape
    assert L == H * W, "input feature has wrong size"

    x_norm = _layer_norm(x, params["ln_gamma"], params["ln_beta"])
    xr = x_norm.reshape(B, H, W, C)                  # NHWC (Swin-native)
    identity = xr

    # ---- BSAN ----
    grad_mag = sobel_grad_magnitude_mean(xr)         # (B, H, W, 1), Pallas kernel

    f = jax.lax.conv_general_dilated(
        grad_mag, params["w_ext"], window_strides=(1, 1), padding="SAME",
        dimension_numbers=("NHWC", "HWIO", "NHWC")) + params["b_ext"]
    f = jax.nn.relu(_batch_norm(f, params["bn1_gamma"], params["bn1_beta"]))

    a = jax.lax.conv_general_dilated(
        f, params["w_fus"], window_strides=(1, 1), padding="SAME",
        dimension_numbers=("NHWC", "HWIO", "NHWC")) + params["b_fus"]
    a = _batch_norm(a, params["bn2_gamma"], params["bn2_beta"])
    att = jax.nn.sigmoid(a)                          # (B, H, W, C)

    enhanced = xr * att

    # Squeeze-Excitation
    y = jnp.mean(enhanced, axis=(1, 2))              # (B, C)
    y = jax.nn.relu(y @ params["w_se1"])
    y = jax.nn.sigmoid(y @ params["w_se2"])
    refined = enhanced * y[:, None, None, :]

    # TODO(synk): upstream BSAN adds the NHWC `identity` to NCHW features (shape
    # bug unless H == C); we implement the intended layout-consistent residual.
    out = refined + identity

    x_enhanced = out.reshape(B, H * W, C)
    return x + x_enhanced


# ----------------------------------------------------------------------------
# Reference (conv-based) for the Pallas kernel's math
# ----------------------------------------------------------------------------
def _sobel_mag_mean_reference(x_nhwc):
    b, h, w, c = x_nhwc.shape
    kx = jnp.array([[-1., 0., 1.], [-2., 0., 2.], [-1., 0., 1.]],
                   jnp.float32).reshape(1, 1, 3, 3)
    ky = jnp.array([[-1., -2., -1.], [0., 0., 0.], [1., 2., 1.]],
                   jnp.float32).reshape(1, 1, 3, 3)
    xc = jnp.transpose(x_nhwc, (0, 3, 1, 2)).reshape(b * c, 1, h, w)

    def conv(img, k):
        return jax.lax.conv_general_dilated(
            img, k, (1, 1), ((1, 1), (1, 1)),
            dimension_numbers=("NCHW", "OIHW", "NCHW"))

    mag = jnp.sqrt(conv(xc, kx) ** 2 + conv(xc, ky) ** 2).reshape(b, c, h, w)
    return jnp.transpose(jnp.mean(mag, axis=1, keepdims=True), (0, 2, 3, 1))


if __name__ == "__main__":
    key = jax.random.PRNGKey(0)
    B, dim = 2, 32
    input_resolution = (16, 16)
    H, W = input_resolution

    kx_key, kp_key = jax.random.split(key)
    x = jax.random.normal(kx_key, (B, H * W, dim), dtype=jnp.float32)
    params = init_params(kp_key, dim)

    # 1) Pallas kernel vs conv-based reference (f32).
    xr = _layer_norm(x, params["ln_gamma"], params["ln_beta"]).reshape(B, H, W, dim)
    got = sobel_grad_magnitude_mean(xr)
    jax.block_until_ready(got)
    ref = _sobel_mag_mean_reference(xr)
    assert got.shape == (B, H, W, 1)
    err = float(jnp.max(jnp.abs(got - ref)))
    assert jnp.allclose(got, ref, atol=1e-4, rtol=1e-4), err

    # 2) B=1 forces the H-split grid (row strips with real neighbour halo rows).
    x1 = xr[:1]
    got1 = sobel_grad_magnitude_mean(x1)
    jax.block_until_ready(got1)
    ref1 = _sobel_mag_mean_reference(x1)
    err1 = float(jnp.max(jnp.abs(got1 - ref1)))
    assert jnp.allclose(got1, ref1, atol=1e-4, rtol=1e-4), err1

    # 3) bf16 input exercises the bf16 scratch path on v6e/v7x (f32 fallback on
    #    older chips); loose tolerance because the reference runs in f32.
    xb = xr.astype(jnp.bfloat16)
    gotb = sobel_grad_magnitude_mean(xb)
    jax.block_until_ready(gotb)
    refb = _sobel_mag_mean_reference(xb.astype(jnp.float32))
    errb = float(jnp.max(jnp.abs(gotb - refb)))
    assert jnp.allclose(gotb, refb, atol=0.25, rtol=0.1), errb

    # 4) Full module forward.
    fwd = jax.jit(lambda p, xx: bsan_for_swin_forward(p, xx, input_resolution))
    out = fwd(params, x)
    jax.block_until_ready(out)
    assert out.shape == (B, H * W, dim)
    assert bool(jnp.all(jnp.isfinite(out)))

    print("KERNEL_OK")
</pallas_src>

<mosaic_0001>
module attributes {stable_mosaic.version = 11 : i64} {
  func.func @_sobel_mag_mean_kernel(%arg0: i32, %arg1: i32, %arg2: memref<1x16x16x32xf32, #tpu.memory_space<vmem>>, %arg3: memref<1x1x16x32xf32, #tpu.memory_space<vmem>>, %arg4: memref<1x1x16x32xf32, #tpu.memory_space<vmem>>, %arg5: memref<1x16x16xf32, #tpu.memory_space<vmem>>, %arg6: memref<1x18x32x32xf32, #tpu.memory_space<vmem>>) attributes {dimension_semantics = [#tpu.dimension_semantics<parallel>, #tpu.dimension_semantics<parallel>], iteration_bounds = array<i64: 2, 1>, scalar_prefetch = 0 : i64, scratch_operands = 1 : i64, tpu.core_type = #tpu.core_type<tc>, window_params = [{transform_indices = @transform_0, window_bounds = array<i64: 1, 16, 16, 32>}, {transform_indices = @transform_1, window_bounds = array<i64: 1, 1, 16, 32>}, {transform_indices = @transform_2, window_bounds = array<i64: 1, 1, 16, 32>}, {transform_indices = @transform_3, window_bounds = array<i64: 1, 16, 16>}]} {
    %cst = arith.constant 0.000000e+00 : f32
    %0 = vector.broadcast %cst : f32 to vector<1x18x8x32xf32>
    %c0 = arith.constant 0 : index
    %c0_0 = arith.constant 0 : index
    %c0_1 = arith.constant 0 : index
    %c0_2 = arith.constant 0 : index
    %1 = vector.load %arg6[%c0, %c0_0, %c0_1, %c0_2] : memref<1x18x32x32xf32, #tpu.memory_space<vmem>>, vector<1x18x8x32xf32>
    tpu.vector_store %arg6[%c0, %c0_0, %c0_1, %c0_2], %0 {strides = array<i32>} : memref<1x18x32x32xf32, #tpu.memory_space<vmem>>, vector<1x18x8x32xf32>,
    %c0_3 = arith.constant 0 : index
    %c0_4 = arith.constant 0 : index
    %c24 = arith.constant 24 : index
    %c0_5 = arith.constant 0 : index
    %2 = vector.load %arg6[%c0_3, %c0_4, %c24, %c0_5] : memref<1x18x32x32xf32, #tpu.memory_space<vmem>>, vector<1x18x8x32xf32>
    tpu.vector_store %arg6[%c0_3, %c0_4, %c24, %c0_5], %0 {strides = array<i32>} : memref<1x18x32x32xf32, #tpu.memory_space<vmem>>, vector<1x18x8x32xf32>,
    %cst_6 = arith.constant 0.000000e+00 : f32
    %3 = vector.broadcast %cst_6 : f32 to vector<1x1x16x32xf32>
    %c0_7 = arith.constant 0 : index
    %c0_8 = arith.constant 0 : index
    %c8 = arith.constant 8 : index
    %c0_9 = arith.constant 0 : index
    %4 = vector.load %arg6[%c0_7, %c0_8, %c8, %c0_9] : memref<1x18x32x32xf32, #tpu.memory_space<vmem>>, vector<1x1x16x32xf32>
    tpu.vector_store %arg6[%c0_7, %c0_8, %c8, %c0_9], %3 {strides = array<i32>} : memref<1x18x32x32xf32, #tpu.memory_space<vmem>>, vector<1x1x16x32xf32>,
    %c0_i32 = arith.constant 0 : i32
    %5 = arith.cmpi sgt, %arg1, %c0_i32 : i32
    %6 = arith.extui %5 : i1 to i32
    %c0_i32_10 = arith.constant 0 : i32
    %7 = arith.cmpi ne, %6, %c0_i32_10 : i32
    scf.if %7 {
      %c0_40 = arith.constant 0 : index
      %c0_41 = arith.constant 0 : index
      %c0_42 = arith.constant 0 : index
      %c0_43 = arith.constant 0 : index
      %40 = vector.load %arg3[%c0_40, %c0_41, %c0_42, %c0_43] : memref<1x1x16x32xf32, #tpu.memory_space<vmem>>, vector<1x1x16x32xf32>
      %c0_44 = arith.constant 0 : index
      %c0_45 = arith.constant 0 : index
      %c8_46 = arith.constant 8 : index
      %c0_47 = arith.constant 0 : index
      %41 = vector.load %arg6[%c0_44, %c0_45, %c8_46, %c0_47] : memref<1x18x32x32xf32, #tpu.memory_space<vmem>>, vector<1x1x16x32xf32>
      tpu.vector_store %arg6[%c0_44, %c0_45, %c8_46, %c0_47], %40 {strides = array<i32>} : memref<1x18x32x32xf32, #tpu.memory_space<vmem>>, vector<1x1x16x32xf32>,
    } else {
    }
    %c0_11 = arith.constant 0 : index
    %c17 = arith.constant 17 : index
    %c8_12 = arith.constant 8 : index
    %c0_13 = arith.constant 0 : index
    %8 = vector.load %arg6[%c0_11, %c17, %c8_12, %c0_13] : memref<1x18x32x32xf32, #tpu.memory_space<vmem>>, vector<1x1x16x32xf32>
    tpu.vector_store %arg6[%c0_11, %c17, %c8_12, %c0_13], %3 {strides = array<i32>} : memref<1x18x32x32xf32, #tpu.memory_space<vmem>>, vector<1x1x16x32xf32>,
    %c0_i32_14 = arith.constant 0 : i32
    %9 = arith.cmpi slt, %arg1, %c0_i32_14 : i32
    %10 = arith.extui %9 : i1 to i32
    %c0_i32_15 = arith.constant 0 : i32
    %11 = arith.cmpi ne, %10, %c0_i32_15 : i32
    scf.if %11 {
      %c0_40 = arith.constant 0 : index
      %c0_41 = arith.constant 0 : index
      %c0_42 = arith.constant 0 : index
      %c0_43 = arith.constant 0 : index
      %40 = vector.load %arg4[%c0_40, %c0_41, %c0_42, %c0_43] : memref<1x1x16x32xf32, #tpu.memory_space<vmem>>, vector<1x1x16x32xf32>
      %c0_44 = arith.constant 0 : index
      %c17_45 = arith.constant 17 : index
      %c8_46 = arith.constant 8 : index
      %c0_47 = arith.constant 0 : index
      %41 = vector.load %arg6[%c0_44, %c17_45, %c8_46, %c0_47] : memref<1x18x32x32xf32, #tpu.memory_space<vmem>>, vector<1x1x16x32xf32>
      tpu.vector_store %arg6[%c0_44, %c17_45, %c8_46, %c0_47], %40 {strides = array<i32>} : memref<1x18x32x32xf32, #tpu.memory_space<vmem>>, vector<1x1x16x32xf32>,
    } else {
    }
    %c0_16 = arith.constant 0 : index
    %c0_17 = arith.constant 0 : index
    %c0_18 = arith.constant 0 : index
    %c0_19 = arith.constant 0 : index
    %12 = vector.load %arg2[%c0_16, %c0_17, %c0_18, %c0_19] : memref<1x16x16x32xf32, #tpu.memory_space<vmem>>, vector<1x16x16x32xf32>
    %c0_20 = arith.constant 0 : index
    %c1 = arith.constant 1 : index
    %c8_21 = arith.constant 8 : index
    %c0_22 = arith.constant 0 : index
    %13 = vector.load %arg6[%c0_20, %c1, %c8_21, %c0_22] : memref<1x18x32x32xf32, #tpu.memory_space<vmem>>, vector<1x16x16x32xf32>
    tpu.vector_store %arg6[%c0_20, %c1, %c8_21, %c0_22], %12 {strides = array<i32>} : memref<1x18x32x32xf32, #tpu.memory_space<vmem>>, vector<1x16x16x32xf32>,
    %c0_23 = arith.constant 0 : index
    %c0_24 = arith.constant 0 : index
    %c7 = arith.constant 7 : index
    %c0_25 = arith.constant 0 : index
    %14 = vector.load %arg6[%c0_23, %c0_24, %c7, %c0_25] : memref<1x18x32x32xf32, #tpu.memory_space<vmem>>, vector<1x16x18x32xf32>
    %c0_26 = arith.constant 0 : index
    %c1_27 = arith.constant 1 : index
    %c7_28 = arith.constant 7 : index
    %c0_29 = arith.constant 0 : index
    %15 = vector.load %arg6[%c0_26, %c1_27, %c7_28, %c0_29] : memref<1x18x32x32xf32, #tpu.memory_space<vmem>>, vector<1x16x18x32xf32>
    %c0_30 = arith.constant 0 : index
    %c2 = arith.constant 2 : index
    %c7_31 = arith.constant 7 : index
    %c0_32 = arith.constant 0 : index
    %16 = vector.load %arg6[%c0_30, %c2, %c7_31, %c0_32] : memref<1x18x32x32xf32, #tpu.memory_space<vmem>>, vector<1x16x18x32xf32>
    %cst_33 = arith.constant 2.000000e+00 : f32
    %17 = vector.broadcast %cst_33 : f32 to vector<1x16x18x32xf32>
    %18 = arith.mulf %17, %15 : vector<1x16x18x32xf32>
    %19 = arith.addf %14, %18 : vector<1x16x18x32xf32>
    %20 = arith.addf %19, %16 : vector<1x16x18x32xf32>
    %21 = arith.subf %16, %14 : vector<1x16x18x32xf32>
    %22 = vector.extract_strided_slice %20 {offsets = [0, 0, 2, 0], sizes = [1, 16, 16, 32], strides = [1, 1, 1, 1]} : vector<1x16x18x32xf32> to vector<1x16x16x32xf32>
    %23 = vector.extract_strided_slice %20 {offsets = [0, 0, 0, 0], sizes = [1, 16, 16, 32], strides = [1, 1, 1, 1]} : vector<1x16x18x32xf32> to vector<1x16x16x32xf32>
    %24 = arith.subf %22, %23 : vector<1x16x16x32xf32>
    %25 = vector.extract_strided_slice %21 {offsets = [0, 0, 0, 0], sizes = [1, 16, 16, 32], strides = [1, 1, 1, 1]} : vector<1x16x18x32xf32> to vector<1x16x16x32xf32>
    %26 = vector.extract_strided_slice %21 {offsets = [0, 0, 1, 0], sizes = [1, 16, 16, 32], strides = [1, 1, 1, 1]} : vector<1x16x18x32xf32> to vector<1x16x16x32xf32>
    %cst_34 = arith.constant 2.000000e+00 : f32
    %27 = vector.broadcast %cst_34 : f32 to vector<1x16x16x32xf32>
    %28 = arith.mulf %27, %26 : vector<1x16x16x32xf32>
    %29 = arith.addf %25, %28 : vector<1x16x16x32xf32>
    %30 = vector.extract_strided_slice %21 {offsets = [0, 0, 2, 0], sizes = [1, 16, 16, 32], strides = [1, 1, 1, 1]} : vector<1x16x18x32xf32> to vector<1x16x16x32xf32>
    %31 = arith.addf %29, %30 : vector<1x16x16x32xf32>
    %32 = arith.mulf %24, %24 : vector<1x16x16x32xf32>
    %33 = arith.mulf %31, %31 : vector<1x16x16x32xf32>
    %34 = arith.addf %32, %33 : vector<1x16x16x32xf32>
    %35 = math.sqrt %34 : vector<1x16x16x32xf32>
    %cst_35 = arith.constant dense<0.000000e+00> : vector<1x16x16xf32>
    %36 = vector.multi_reduction <add>, %35, %cst_35 [3] : vector<1x16x16x32xf32> to vector<1x16x16xf32>
    %cst_36 = arith.constant 3.200000e+01 : f32
    %37 = vector.broadcast %cst_36 : f32 to vector<1x16x16xf32>
    %38 = arith.divf %36, %37 : vector<1x16x16xf32>
    %c0_37 = arith.constant 0 : index
    %c0_38 = arith.constant 0 : index
    %c0_39 = arith.constant 0 : index
    %39 = vector.load %arg5[%c0_37, %c0_38, %c0_39] : memref<1x16x16xf32, #tpu.memory_space<vmem>>, vector<1x16x16xf32>
    tpu.vector_store %arg5[%c0_37, %c0_38, %c0_39], %38 {strides = array<i32>} : memref<1x16x16xf32, #tpu.memory_space<vmem>>, vector<1x16x16xf32>,
    return
  }
  func.func @transform_0(%arg0: i32, %arg1: i32) -> (i32, i32, i32, i32) {
    %c0_i32 = arith.constant 0 : i32
    %c0_i32_0 = arith.constant 0 : i32
    %c0_i32_1 = arith.constant 0 : i32
    return %arg0, %arg1, %c0_i32, %c0_i32_0 : i32, i32, i32, i32
  }
  func.func @transform_1(%arg0: i32, %arg1: i32) -> (i32, i32, i32, i32) {
    %c16_i32 = arith.constant 16 : i32
    %0 = arith.muli %arg1, %c16_i32 : i32
    %c1_i32 = arith.constant 1 : i32
    %1 = arith.subi %0, %c1_i32 : i32
    %c0_i32 = arith.constant 0 : i32
    %2 = arith.maxsi %1, %c0_i32 : i32
    %c0_i32_0 = arith.constant 0 : i32
    %c0_i32_1 = arith.constant 0 : i32
    %c0_i32_2 = arith.constant 0 : i32
    return %arg0, %2, %c0_i32_0, %c0_i32_1 : i32, i32, i32, i32
  }
  func.func @transform_2(%arg0: i32, %arg1: i32) -> (i32, i32, i32, i32) {
    %c16_i32 = arith.constant 16 : i32
    %0 = arith.muli %arg1, %c16_i32 : i32
    %c16_i32_0 = arith.constant 16 : i32
    %1 = arith.addi %0, %c16_i32_0 : i32
    %c15_i32 = arith.constant 15 : i32
    %2 = arith.minsi %1, %c15_i32 : i32
    %c0_i32 = arith.constant 0 : i32
    %c0_i32_1 = arith.constant 0 : i32
    %c0_i32_2 = arith.constant 0 : i32
    return %arg0, %2, %c0_i32, %c0_i32_1 : i32, i32, i32, i32
  }
  func.func @transform_3(%arg0: i32, %arg1: i32) -> (i32, i32, i32) {
    %c0_i32 = arith.constant 0 : i32
    %c0_i32_0 = arith.constant 0 : i32
    return %arg0, %arg1, %c0_i32 : i32, i32, i32
  }
}

</mosaic_0001>

<llo_original>
// kernel: tpu_custom_call.1
$region0: #{tpu_custom_call.1}
  #allocation0 [shape = 'u32[]', space=smem, size = 0x4, offset = 0x4, fixed_abs, tag = 'smem constant byte address 0x4 - core index']
  #allocation1 [shape = 'u32[144,128]{1,0:T(1,128)}', space=vmem, size = 0x12000, scoped, tag = 'internal scratch']
  #allocation2 [shape = 'f32[1,18,32,32]{3,2,1,0:T(8,128)}', space=vmem, size = 0x48000, scoped, tag = 'scratch operand']
  %s0 = inlined_call_operand.hbm [shape: f32[2,16,16,32], index: 0, kind: input, shape index: {}]
  %s1 = inlined_call_operand.hbm [shape: f32[2,16,16,32], index: 1, kind: input, shape index: {}]
  %s2 = inlined_call_operand.hbm [shape: f32[2,16,16,32], index: 2, kind: input, shape index: {}]
  %s3 = inlined_call_operand.hbm [shape: f32[2,16,16], index: 3, kind: output, shape index: {}]
  %s4 = sld [smem:[#allocation0]]
  $region65: #{tpu_custom_call.1} parent=0
    _
  %s6 = ssub.s32 1, %s4
  %s7 = scalar_select 0, %s6, %s4
  $region1: #{tpu_custom_call.1} parent=0
    #allocation3 [shape = 'u8[262144]{0}', space=vmem, size = 0x40000, scoped, tag = 'input window, operand 0']
    #allocation4 [shape = 's32[2]{0}', space=sflag, size = 0x8, scoped, tag = 'scoped memory for tpu_custom_call.1']
    #allocation5 [shape = 's32[2]{0}', space=sflag, size = 0x8, scoped, tag = 'scoped memory for tpu_custom_call.1']
    #allocation6 [shape = 'u8[16384]{0}', space=vmem, size = 0x4000, scoped, tag = 'input window, operand 1']
    #allocation7 [shape = 's32[2]{0}', space=sflag, size = 0x8, scoped, tag = 'scoped memory for tpu_custom_call.1']
    #allocation8 [shape = 'u8[16384]{0}', space=vmem, size = 0x4000, scoped, tag = 'input window, operand 2']
    #allocation9 [shape = 'u8[16384]{0}', space=vmem, size = 0x4000, scoped, tag = 'output window, operand 0']
    %8 = vsyncpa [#allocation4], 0
    %s9 = scalar_lea.sflag [#allocation4], 1
    %10 = vsyncpa %s9, 0
    %11 = vsyncpa [#allocation7], 0
    %s12 = scalar_lea.sflag [#allocation7], 1
    %13 = vsyncpa %s12, 0
    %14 = vsyncpa [#allocation5], 0
    %s15 = scalar_lea.sflag [#allocation5], 1
    %16 = vsyncpa %s15, 0
    loop: start=0, step=1, limit=4
    $region2: #{tpu_custom_call.1} parent=1 // loop_pre_header
      _
    $region3: #{tpu_custom_call.1} parent=1 // loop_header
      %s18 = sphi 0, %s22
      %p19 = scmp.ge.s32.totalorder %s18, 4
      %s25 = sphi 0, %s37
      %s26 = sphi 0, %s33
      %s27 = sphi 0, %s25
      %s28 = sphi 0, %s26
      %s29 = sphi 0, %s27
      %s30 = sphi 0, %s28
      %s42 = sphi 0, %s44
      %s45 = sphi 0, %s42
      %s46 = sphi 0, %s45
      %s62 = sphi 0, %s46
      %s78 = sphi 0, %s80
      %s81 = sphi 0, %s78
      %s82 = sphi 0, %s81
      %s98 = sphi 0, %s82
      %s114 = sphi 0, %s116
      %s117 = sphi 0, %s114
      %s118 = sphi 0, %s117
      %s134 = sphi 0, %s118
      %s142 = sphi 0, %s144
      %s145 = sphi 0, %s142
      %s146 = sphi 0, %s145
      %s162 = sphi 0, %s146
    $region4: #{tpu_custom_call.1} parent=1 // loop_header_branch
      %21 = sbr.rel (%p19) target = $region8
    $region5: #{tpu_custom_call.1} parent=1 // loop_body
      %s23 = ssub.s32 %s18, 1
      %s24 = ssub.s32 %s18, 2
      %s31 = sadd.s32 1, %s26
      %p32 = scmp.ge.s32.totalorder %s31, 1
      %s33 = scalar_select %p32, 0, %s31
      %s34 = sadd.s32 1, %s25
      %s35 = scalar_select %p32, %s34, %s25
      %p36 = scmp.ge.s32.totalorder %s35, 2
      %s37 = scalar_select %p36, 0, %s35
      %s38 = ssub.s32 %s25, %s37
      %s39 = ssub.s32 %s26, %s33
      %s40 = sor.u32 %s38, %s39
      %p41 = scmp.eq.s32.totalorder %s40, 0
      %s43 = sadd.s32 %s42, 1
      %s44 = scalar_select %p41, %s42, %s43
      %p47 = pneg %p41
      %p48 = scmp.eq.s32.totalorder %s18, 1
      %p49 = por %p47, %p48
      %p50 = scmp.ne.s32.totalorder %s42, %s45
      %p51 = scmp.eq.s32.totalorder %s18, 0
      %p52 = por %p50, %p51
      %p53 = scmp.ne.s32.totalorder %s42, %s45
      %p54 = scmp.eq.s32.totalorder %s23, 1
      %p55 = por %p53, %p54
      %p56 = scmp.ne.s32.totalorder %s45, %s46
      %p57 = scmp.eq.s32.totalorder %s23, 0
      %p58 = por %p56, %p57
      %p59 = scmp.ne.s32.totalorder %s45, %s46
      %p60 = scmp.eq.s32.totalorder %s24, 1
      %p61 = por %p59, %p60
      %p63 = scmp.ne.s32.totalorder %s46, %s62
      %p64 = scmp.eq.s32.totalorder %s24, 0
      %p65 = por %p63, %p64
      %s66 = smul.u32 %s26, 16
      %s67 = ssub.s32 %s66, 1
      %p68 = scmp.gt.s32.totalorder %s67, 0
      %s69 = scalar_select %p68, %s67, 0
      %s70 = smul.u32 %s33, 16
      %s71 = ssub.s32 %s70, 1
      %p72 = scmp.gt.s32.totalorder %s71, 0
      %s73 = scalar_select %p72, %s71, 0
      %s74 = ssub.s32 %s25, %s37
      %s75 = ssub.s32 %s69, %s73
      %s76 = sor.u32 %s74, %s75
      %p77 = scmp.eq.s32.totalorder %s76, 0
      %s79 = sadd.s32 %s78, 1
      %s80 = scalar_select %p77, %s78, %s79
      %p83 = pneg %p77
      %p84 = scmp.eq.s32.totalorder %s18, 1
      %p85 = por %p83, %p84
      %p86 = scmp.ne.s32.totalorder %s78, %s81
      %p87 = scmp.eq.s32.totalorder %s18, 0
      %p88 = por %p86, %p87
      %p89 = scmp.ne.s32.totalorder %s78, %s81
      %p90 = scmp.eq.s32.totalorder %s23, 1
      %p91 = por %p89, %p90
      %p92 = scmp.ne.s32.totalorder %s81, %s82
      %p93 = scmp.eq.s32.totalorder %s23, 0
      %p94 = por %p92, %p93
      %p95 = scmp.ne.s32.totalorder %s81, %s82
      %p96 = scmp.eq.s32.totalorder %s24, 1
      %p97 = por %p95, %p96
      %p99 = scmp.ne.s32.totalorder %s82, %s98
      %p100 = scmp.eq.s32.totalorder %s24, 0
      %p101 = por %p99, %p100
      %s102 = smul.u32 %s26, 16
      %s103 = sadd.s32 %s102, 16
      %p104 = scmp.lt.s32.totalorder %s103, 15
      %s105 = scalar_select %p104, %s103, 15
      %s106 = smul.u32 %s33, 16
      %s107 = sadd.s32 %s106, 16
      %p108 = scmp.lt.s32.totalorder %s107, 15
      %s109 = scalar_select %p108, %s107, 15
      %s110 = ssub.s32 %s25, %s37
      %s111 = ssub.s32 %s105, %s109
      %s112 = sor.u32 %s110, %s111
      %p113 = scmp.eq.s32.totalorder %s112, 0
      %s115 = sadd.s32 %s114, 1
      %s116 = scalar_select %p113, %s114, %s115
      %p119 = pneg %p113
      %p120 = scmp.eq.s32.totalorder %s18, 1
      %p121 = por %p119, %p120
      %p122 = scmp.ne.s32.totalorder %s114, %s117
      %p123 = scmp.eq.s32.totalorder %s18, 0
      %p124 = por %p122, %p123
      %p125 = scmp.ne.s32.totalorder %s114, %s117
      %p126 = scmp.eq.s32.totalorder %s23, 1
      %p127 = por %p125, %p126
      %p128 = scmp.ne.s32.totalorder %s117, %s118
      %p129 = scmp.eq.s32.totalorder %s23, 0
      %p130 = por %p128, %p129
      %p131 = scmp.ne.s32.totalorder %s117, %s118
      %p132 = scmp.eq.s32.totalorder %s24, 1
      %p133 = por %p131, %p132
      %p135 = scmp.ne.s32.totalorder %s118, %s134
      %p136 = scmp.eq.s32.totalorder %s24, 0
      %p137 = por %p135, %p136
      %s138 = ssub.s32 %s25, %s37
      %s139 = ssub.s32 %s26, %s33
      %s140 = sor.u32 %s138, %s139
      %p141 = scmp.eq.s32.totalorder %s140, 0
      %s143 = sadd.s32 %s142, 1
      %s144 = scalar_select %p141, %s142, %s143
      %p147 = pneg %p141
      %p148 = scmp.eq.s32.totalorder %s18, 1
      %p149 = por %p147, %p148
      %p150 = scmp.ne.s32.totalorder %s142, %s145
      %p151 = scmp.eq.s32.totalorder %s18, 0
      %p152 = por %p150, %p151
      %p153 = scmp.ne.s32.totalorder %s142, %s145
      %p154 = scmp.eq.s32.totalorder %s23, 1
      %p155 = por %p153, %p154
      %p156 = scmp.ne.s32.totalorder %s145, %s146
      %p157 = scmp.eq.s32.totalorder %s23, 0
      %p158 = por %p156, %p157
      %p159 = scmp.ne.s32.totalorder %s145, %s146
      %p160 = scmp.eq.s32.totalorder %s24, 1
      %p161 = por %p159, %p160
      %p163 = scmp.ne.s32.totalorder %s146, %s162
      %p164 = scmp.eq.s32.totalorder %s24, 0
      %p165 = por %p163, %p164
      %p166 = scmp.le.s32.totalorder 1, %s18
      %p167 = scmp.lt.s32.totalorder %s18, 3
      %p168 = pnand %p166, %p167
      %p169 = pneg %p168
      // Predicated region
      $region9: #{tpu_custom_call.1} parent=5 // pred_check
        _
      $region10: #{tpu_custom_call.1} parent=5 // pred_check_branch
        %171 = sbr.rel (%p168) target = $region12
      $region11: #{tpu_custom_call.1} parent=5 // pred_region
        %s172 = ssub.s32 %s18, 1
      $region12: #{tpu_custom_call.1} parent=5 // pred_fallthru
        _
      %p173 = scmp.lt.s32.totalorder %s18, 2
      // Predicated region
      $region13: #{tpu_custom_call.1} parent=5 // pred_check
        %p174 = pneg %p173
      $region14: #{tpu_custom_call.1} parent=5 // pred_check_branch
        %176 = sbr.rel (%p174) target = $region16
      $region15: #{tpu_custom_call.1} parent=5 // pred_region
        // Predicated region
        $region17: #{tpu_custom_call.1} parent=15 // pred_check
          %p177 = pneg %p52
        $region18: #{tpu_custom_call.1} parent=15 // pred_check_branch
          %179 = sbr.rel (%p177) target = $region20
        $region19: #{tpu_custom_call.1} parent=15 // pred_region
          %s180 = sand.u32 %s42, 1
          %s181 = scalar_lea.sflag [#allocation4], %s180
          %s182 = sand.u32 %s42, 1
          %s183 = smul.addr %s182, 256
          %s184 = scalar_lea.vmem [#allocation3], %s183
          %s185 = smul.u32 16, %s26
          %s187 = ssub.s32 4096, 4096
          %188 = vsyncadd %s181, %s187
          %s189 = smul.addr %s185, 2
          %s190 = smul.addr %s25, 32
          %s191 = sadd.s32 %s189, %s190
          %s192 = smul.addr %s191, 128
          %s193 = scalar_lea.hbm %s0, %s192
          %s194 = sshll.u32 %s184, 4
          %s195 = int_to_ptr.vmem [resolvable:$true] %s194
          %200 = dma.hbm_to_vmem [thread:$0]  %s193, 4096, %s195, %s181, 128, 128, 8
        $region20: #{tpu_custom_call.1} parent=15 // pred_fallthru
          _
        // Predicated region
        $region21: #{tpu_custom_call.1} parent=15 // pred_check
          %p201 = pneg %p88
        $region22: #{tpu_custom_call.1} parent=15 // pred_check_branch
          %203 = sbr.rel (%p201) target = $region24
        $region23: #{tpu_custom_call.1} parent=15 // pred_region
          %s204 = sand.u32 %s18, 1
          %s205 = scalar_lea.sflag [#allocation7], %s204
          %s206 = sand.u32 %s78, 1
          %s207 = smul.addr %s206, 16
          %s208 = scalar_lea.vmem [#allocation6], %s207
          %s209 = smul.u32 %s26, 16
          %s210 = ssub.s32 %s209, 1
          %p211 = scmp.gt.s32.totalorder %s210, 0
          %s212 = scalar_select %p211, %s210, 0
          %s214 = ssub.s32 256, 256
          %215 = vsyncadd %s205, %s214
          %s216 = smul.addr %s212, 2
          %s217 = smul.addr %s25, 32
          %s218 = sadd.s32 %s216, %s217
          %s219 = smul.addr %s218, 128
          %s220 = scalar_lea.hbm %s1, %s219
          %s221 = sshll.u32 %s208, 4
          %s222 = int_to_ptr.vmem [resolvable:$true] %s221
          %227 = dma.hbm_to_vmem [thread:$0]  %s220, 256, %s222, %s205, 128, 128, 8
        $region24: #{tpu_custom_call.1} parent=15 // pred_fallthru
          _
        // Predicated region
        $region25: #{tpu_custom_call.1} parent=15 // pred_check
          %p228 = pneg %p124
        $region26: #{tpu_custom_call.1} parent=15 // pred_check_branch
          %230 = sbr.rel (%p228) target = $region28
        $region27: #{tpu_custom_call.1} parent=15 // pred_region
          %s231 = sand.u32 %s18, 1
          %s232 = scalar_lea.sflag [#allocation7], %s231
          %s233 = sand.u32 %s114, 1
          %s234 = smul.addr %s233, 16
          %s235 = scalar_lea.vmem [#allocation8], %s234
          %s236 = smul.u32 %s26, 16
          %s237 = sadd.s32 %s236, 16
          %p238 = scmp.lt.s32.totalorder %s237, 15
          %s239 = scalar_select %p238, %s237, 15
          %s241 = ssub.s32 256, 256
          %242 = vsyncadd %s232, %s241
          %s243 = smul.addr %s239, 2
          %s244 = smul.addr %s25, 32
          %s245 = sadd.s32 %s243, %s244
          %s246 = smul.addr %s245, 128
          %s247 = scalar_lea.hbm %s2, %s246
          %s248 = sshll.u32 %s235, 4
          %s249 = int_to_ptr.vmem [resolvable:$true] %s248
          %254 = dma.hbm_to_vmem [thread:$0]  %s247, 256, %s249, %s232, 128, 128, 8
        $region28: #{tpu_custom_call.1} parent=15 // pred_fallthru
          _
      $region16: #{tpu_custom_call.1} parent=5 // pred_fallthru
        _
      %p255 = scmp.le.s32.totalorder 1, %s18
      %p256 = scmp.lt.s32.totalorder %s18, 3
      %p257 = pnand %p255, %p256
      %p258 = pneg %p257
      // Predicated region
      $region29: #{tpu_custom_call.1} parent=5 // pred_check
        _
      $region30: #{tpu_custom_call.1} parent=5 // pred_check_branch
        %260 = sbr.rel (%p257) target = $region32
      $region31: #{tpu_custom_call.1} parent=5 // pred_region
        %s261 = ssub.s32 %s18, 1
        %s262 = sand.u32 %s45, 1
        %s263 = scalar_lea.sflag [#allocation4], %s262
        %s264 = sand.u32 %s45, 1
        %s265 = smul.addr %s264, 256
        %s266 = scalar_lea.vmem [#allocation3], %s265
        // Predicated region
        $region33: #{tpu_custom_call.1} parent=31 // pred_check
          %p267 = pneg %p58
        $region34: #{tpu_custom_call.1} parent=31 // pred_check_branch
          %269 = sbr.rel (%p267) target = $region36
        $region35: #{tpu_custom_call.1} parent=31 // pred_region
          %270 = dma.done %s263, 4096
        $region36: #{tpu_custom_call.1} parent=31 // pred_fallthru
          _
        %s271 = sand.u32 %s23, 1
        %s272 = scalar_lea.sflag [#allocation7], %s271
        %s273 = sand.u32 %s81, 1
        %s274 = smul.addr %s273, 16
        %s275 = scalar_lea.vmem [#allocation6], %s274
        // Predicated region
        $region37: #{tpu_custom_call.1} parent=31 // pred_check
          %p276 = pneg %p94
        $region38: #{tpu_custom_call.1} parent=31 // pred_check_branch
          %278 = sbr.rel (%p276) target = $region40
        $region39: #{tpu_custom_call.1} parent=31 // pred_region
          %279 = dma.done %s272, 256
        $region40: #{tpu_custom_call.1} parent=31 // pred_fallthru
          _
        %s280 = sand.u32 %s23, 1
        %s281 = scalar_lea.sflag [#allocation7], %s280
        %s282 = sand.u32 %s117, 1
        %s283 = smul.addr %s282, 16
        %s284 = scalar_lea.vmem [#allocation8], %s283
        // Predicated region
        $region41: #{tpu_custom_call.1} parent=31 // pred_check
          %p285 = pneg %p130
        $region42: #{tpu_custom_call.1} parent=31 // pred_check_branch
          %287 = sbr.rel (%p285) target = $region44
        $region43: #{tpu_custom_call.1} parent=31 // pred_region
          %288 = dma.done %s281, 256
        $region44: #{tpu_custom_call.1} parent=31 // pred_fallthru
          _
        %s289 = sand.u32 %s45, 1
        %s290 = scalar_lea.sflag [#allocation4], %s289
        %s291 = sand.u32 %s45, 1
        %s292 = smul.addr %s291, 256
        %s293 = scalar_lea.vmem [#allocation3], %s292
        %p294 = pneg %p58
        %p295 = pneg %p55
        %s296 = sand.u32 %s23, 1
        %s297 = scalar_lea.sflag [#allocation7], %s296
        %s298 = sand.u32 %s81, 1
        %s299 = smul.addr %s298, 16
        %s300 = scalar_lea.vmem [#allocation6], %s299
        %p301 = pneg %p94
        %p302 = pneg %p91
        %s303 = sand.u32 %s23, 1
        %s304 = scalar_lea.sflag [#allocation7], %s303
        %s305 = sand.u32 %s117, 1
        %s306 = smul.addr %s305, 16
        %s307 = scalar_lea.vmem [#allocation8], %s306
        %p308 = pneg %p130
        %p309 = pneg %p127
        %p310 = pneg %p158
        %p311 = pneg %p155
        %s312 = sand.u32 %s145, 1
        %s313 = scalar_lea.sflag [#allocation5], %s312
        %s314 = sand.u32 %s145, 1
        %s315 = smul.addr %s314, 16
        %s316 = scalar_lea.vmem [#allocation9], %s315
        %s317 = smul.u32 16, %s28
        %s318 = smul.u32 %s28, 16
        %s319 = ssub.s32 %s318, 1
        %p320 = scmp.gt.s32.totalorder %s319, 0
        %s321 = scalar_select %p320, %s319, 0
        %s322 = smul.u32 %s28, 16
        %s323 = sadd.s32 %s322, 16
        %p324 = scmp.lt.s32.totalorder %s323, 15
        %s325 = scalar_select %p324, %s323, 15
        %s326 = smul.u32 2, %s28
        %vm327 = vcmask 261120
        %328 = vst.msk [vmem:[#allocation2] sm:$0xff] %vm327, 0.0
        %329 = vst.msk [vmem:[#allocation2 + $0x20] sm:$0xff] %vm327, 0.0
        %330 = vst.msk [vmem:[#allocation2 + $0x40] sm:$0xff] %vm327, 0.0
        %331 = vst.msk [vmem:[#allocation2 + $0x60] sm:$0xff] %vm327, 0.0
        %332 = vst.msk [vmem:[#allocation2 + $0x80] sm:$0xff] %vm327, 0.0
        %333 = vst.msk [vmem:[#allocation2 + $0xa0] sm:$0xff] %vm327, 0.0
        %334 = vst.msk [vmem:[#allocation2 + $0xc0] sm:$0xff] %vm327, 0.0
        %335 = vst.msk [vmem:[#allocation2 + $0xe0] sm:$0xff] %vm327, 0.0
        %336 = vst.msk [vmem:[#allocation2 + $0x100] sm:$0xff] %vm327, 0.0
        %337 = vst.msk [vmem:[#allocation2 + $0x120] sm:$0xff] %vm327, 0.0
        %338 = vst.msk [vmem:[#allocation2 + $0x140] sm:$0xff] %vm327, 0.0
        %339 = vst.msk [vmem:[#allocation2 + $0x160] sm:$0xff] %vm327, 0.0
        %340 = vst.msk [vmem:[#allocation2 + $0x180] sm:$0xff] %vm327, 0.0
        %341 = vst.msk [vmem:[#allocation2 + $0x1a0] sm:$0xff] %vm327, 0.0
        %342 = vst.msk [vmem:[#allocation2 + $0x1c0] sm:$0xff] %vm327, 0.0
        %343 = vst.msk [vmem:[#allocation2 + $0x1e0] sm:$0xff] %vm327, 0.0
        %344 = vst.msk [vmem:[#allocation2 + $0x200] sm:$0xff] %vm327, 0.0
        %345 = vst.msk [vmem:[#allocation2 + $0x220] sm:$0xff] %vm327, 0.0
        %346 = vst.msk [vmem:[#allocation2 + $0x18] sm:$0xff] %vm327, 0.0
        %347 = vst.msk [vmem:[#allocation2 + $0x38] sm:$0xff] %vm327, 0.0
        %348 = vst.msk [vmem:[#allocation2 + $0x58] sm:$0xff] %vm327, 0.0
        %349 = vst.msk [vmem:[#allocation2 + $0x78] sm:$0xff] %vm327, 0.0
        %350 = vst.msk [vmem:[#allocation2 + $0x98] sm:$0xff] %vm327, 0.0
        %351 = vst.msk [vmem:[#allocation2 + $0xb8] sm:$0xff] %vm327, 0.0
        %352 = vst.msk [vmem:[#allocation2 + $0xd8] sm:$0xff] %vm327, 0.0
        %353 = vst.msk [vmem:[#allocation2 + $0xf8] sm:$0xff] %vm327, 0.0
        %354 = vst.msk [vmem:[#allocation2 + $0x118] sm:$0xff] %vm327, 0.0
        %355 = vst.msk [vmem:[#allocation2 + $0x138] sm:$0xff] %vm327, 0.0
        %356 = vst.msk [vmem:[#allocation2 + $0x158] sm:$0xff] %vm327, 0.0
        %357 = vst.msk [vmem:[#allocation2 + $0x178] sm:$0xff] %vm327, 0.0
        %358 = vst.msk [vmem:[#allocation2 + $0x198] sm:$0xff] %vm327, 0.0
        %359 = vst.msk [vmem:[#allocation2 + $0x1b8] sm:$0xff] %vm327, 0.0
        %360 = vst.msk [vmem:[#allocation2 + $0x1d8] sm:$0xff] %vm327, 0.0
        %361 = vst.msk [vmem:[#allocation2 + $0x1f8] sm:$0xff] %vm327, 0.0
        %362 = vst.msk [vmem:[#allocation2 + $0x218] sm:$0xff] %vm327, 0.0
        %363 = vst.msk [vmem:[#allocation2 + $0x238] sm:$0xff] %vm327, 0.0
        %364 = vst.msk [vmem:[#allocation2 + $0x8] sm:$0xff] %vm327, 0.0
        %365 = vst.msk [vmem:[#allocation2 + $0x10] sm:$0xff] %vm327, 0.0
        %p366 = scmp.gt.s32.totalorder %s28, 0
        // Predicated region
        $region45: #{tpu_custom_call.1} parent=31 // pred_check
          %p367 = pneg %p366
        $region46: #{tpu_custom_call.1} parent=31 // pred_check_branch
          %369 = sbr.rel (%p367) target = $region48
        $region47: #{tpu_custom_call.1} parent=31 // pred_region
          %v370 = vld [vmem:[%s275] sm:$0xff]
          %v371 = vld [vmem:[%s275 + $0x8] sm:$0xff]
          %372 = vst.msk [vmem:[#allocation2 + $0x8] sm:$0xff] %vm327, %v370
          %373 = vst.msk [vmem:[#allocation2 + $0x10] sm:$0xff] %vm327, %v371
        $region48: #{tpu_custom_call.1} parent=31 // pred_fallthru
          _
        %s374 = scalar_lea.vmem [#allocation2], 544
        %375 = vst.msk [vmem:[%s374 + $0x8] sm:$0xff] %vm327, 0.0
        %376 = vst.msk [vmem:[%s374 + $0x10] sm:$0xff] %vm327, 0.0
        %p377 = scmp.lt.s32.totalorder %s28, 0
        // Predicated region
        $region49: #{tpu_custom_call.1} parent=31 // pred_check
          %p378 = pneg %p377
        $region50: #{tpu_custom_call.1} parent=31 // pred_check_branch
          %380 = sbr.rel (%p378) target = $region52
        $region51: #{tpu_custom_call.1} parent=31 // pred_region
          %v381 = vld [vmem:[%s284] sm:$0xff]
          %v382 = vld [vmem:[%s284 + $0x8] sm:$0xff]
          %383 = vst.msk [vmem:[%s374 + $0x8] sm:$0xff] %vm327, %v381
          %384 = vst.msk [vmem:[%s374 + $0x10] sm:$0xff] %vm327, %v382
        $region52: #{tpu_custom_call.1} parent=31 // pred_fallthru
          _
        %v385 = vld [vmem:[%s266] sm:$0xff]
        %v386 = vld [vmem:[%s266 + $0x8] sm:$0xff]
        %v387 = vld [vmem:[%s266 + $0x10] sm:$0xff]
        %v388 = vld [vmem:[%s266 + $0x18] sm:$0xff]
        %v389 = vld [vmem:[%s266 + $0x20] sm:$0xff]
        %v390 = vld [vmem:[%s266 + $0x28] sm:$0xff]
        %v391 = vld [vmem:[%s266 + $0x30] sm:$0xff]
        %v392 = vld [vmem:[%s266 + $0x38] sm:$0xff]
        %v393 = vld [vmem:[%s266 + $0x40] sm:$0xff]
        %v394 = vld [vmem:[%s266 + $0x48] sm:$0xff]
        %v395 = vld [vmem:[%s266 + $0x50] sm:$0xff]
        %v396 = vld [vmem:[%s266 + $0x58] sm:$0xff]
        %v397 = vld [vmem:[%s266 + $0x60] sm:$0xff]
        %v398 = vld [vmem:[%s266 + $0x68] sm:$0xff]
        %v399 = vld [vmem:[%s266 + $0x70] sm:$0xff]
        %v400 = vld [vmem:[%s266 + $0x78] sm:$0xff]
        %v401 = vld [vmem:[%s266 + $0x80] sm:$0xff]
        %v402 = vld [vmem:[%s266 + $0x88] sm:$0xff]
        %v403 = vld [vmem:[%s266 + $0x90] sm:$0xff]
        %v404 = vld [vmem:[%s266 + $0x98] sm:$0xff]
        %v405 = vld [vmem:[%s266 + $0xa0] sm:$0xff]
        %v406 = vld [vmem:[%s266 + $0xa8] sm:$0xff]
        %v407 = vld [vmem:[%s266 + $0xb0] sm:$0xff]
        %v408 = vld [vmem:[%s266 + $0xb8] sm:$0xff]
        %v409 = vld [vmem:[%s266 + $0xc0] sm:$0xff]
        %v410 = vld [vmem:[%s266 + $0xc8] sm:$0xff]
        %v411 = vld [vmem:[%s266 + $0xd0] sm:$0xff]
        %v412 = vld [vmem:[%s266 + $0xd8] sm:$0xff]
        %v413 = vld [vmem:[%s266 + $0xe0] sm:$0xff]
        %v414 = vld [vmem:[%s266 + $0xe8] sm:$0xff]
        %v415 = vld [vmem:[%s266 + $0xf0] sm:$0xff]
        %v416 = vld [vmem:[%s266 + $0xf8] sm:$0xff]
        %s417 = scalar_lea.vmem [#allocation2], 32
        %418 = vst.msk [vmem:[%s417 + $0x8] sm:$0xff] %vm327, %v385
        %419 = vst.msk [vmem:[%s417 + $0x10] sm:$0xff] %vm327, %v386
        %420 = vst.msk [vmem:[%s417 + $0x28] sm:$0xff] %vm327, %v387
        %421 = vst.msk [vmem:[%s417 + $0x30] sm:$0xff] %vm327, %v388
        %422 = vst.msk [vmem:[%s417 + $0x48] sm:$0xff] %vm327, %v389
        %423 = vst.msk [vmem:[%s417 + $0x50] sm:$0xff] %vm327, %v390
        %424 = vst.msk [vmem:[%s417 + $0x68] sm:$0xff] %vm327, %v391
        %425 = vst.msk [vmem:[%s417 + $0x70] sm:$0xff] %vm327, %v392
        %426 = vst.msk [vmem:[%s417 + $0x88] sm:$0xff] %vm327, %v393
        %427 = vst.msk [vmem:[%s417 + $0x90] sm:$0xff] %vm327, %v394
        %428 = vst.msk [vmem:[%s417 + $0xa8] sm:$0xff] %vm327, %v395
        %429 = vst.msk [vmem:[%s417 + $0xb0] sm:$0xff] %vm327, %v396
        %430 = vst.msk [vmem:[%s417 + $0xc8] sm:$0xff] %vm327, %v397
        %431 = vst.msk [vmem:[%s417 + $0xd0] sm:$0xff] %vm327, %v398
        %432 = vst.msk [vmem:[%s417 + $0xe8] sm:$0xff] %vm327, %v399
        %433 = vst.msk [vmem:[%s417 + $0xf0] sm:$0xff] %vm327, %v400
        %434 = vst.msk [vmem:[%s417 + $0x108] sm:$0xff] %vm327, %v401
        %435 = vst.msk [vmem:[%s417 + $0x110] sm:$0xff] %vm327, %v402
        %436 = vst.msk [vmem:[%s417 + $0x128] sm:$0xff] %vm327, %v403
        %437 = vst.msk [vmem:[%s417 + $0x130] sm:$0xff] %vm327, %v404
        %438 = vst.msk [vmem:[%s417 + $0x148] sm:$0xff] %vm327, %v405
        %439 = vst.msk [vmem:[%s417 + $0x150] sm:$0xff] %vm327, %v406
        %440 = vst.msk [vmem:[%s417 + $0x168] sm:$0xff] %vm327, %v407
        %441 = vst.msk [vmem:[%s417 + $0x170] sm:$0xff] %vm327, %v408
        %442 = vst.msk [vmem:[%s417 + $0x188] sm:$0xff] %vm327, %v409
        %443 = vst.msk [vmem:[%s417 + $0x190] sm:$0xff] %vm327, %v410
        %444 = vst.msk [vmem:[%s417 + $0x1a8] sm:$0xff] %vm327, %v411
        %445 = vst.msk [vmem:[%s417 + $0x1b0] sm:$0xff] %vm327, %v412
        %446 = vst.msk [vmem:[%s417 + $0x1c8] sm:$0xff] %vm327, %v413
        %447 = vst.msk [vmem:[%s417 + $0x1d0] sm:$0xff] %vm327, %v414
        %448 = vst.msk [vmem:[%s417 + $0x1e8] sm:$0xff] %vm327, %v415
        %449 = vst.msk [vmem:[%s417 + $0x1f0] sm:$0xff] %vm327, %v416
        %v450 = vld [vmem:[#allocation2 + $0x7] sm:$0xff]
        %v451 = vld [vmem:[#allocation2 + $0xf] sm:$0xff]
        %v452 = vld [vmem:[#allocation2 + $0x17] sm:$0x3]
        %v453 = vld [vmem:[#allocation2 + $0x27] sm:$0xff]
        %v454 = vld [vmem:[#allocation2 + $0x2f] sm:$0xff]
        %v455 = vld [vmem:[#allocation2 + $0x37] sm:$0x3]
        %v456 = vld [vmem:[#allocation2 + $0x47] sm:$0xff]
        %v457 = vld [vmem:[#allocation2 + $0x4f] sm:$0xff]
        %v458 = vld [vmem:[#allocation2 + $0x57] sm:$0x3]
        %v459 = vld [vmem:[#allocation2 + $0x67] sm:$0xff]
        %v460 = vld [vmem:[#allocation2 + $0x6f] sm:$0xff]
        %v461 = vld [vmem:[#allocation2 + $0x77] sm:$0x3]
        %v462 = vld [vmem:[#allocation2 + $0x87] sm:$0xff]
        %v463 = vld [vmem:[#allocation2 + $0x8f] sm:$0xff]
        %v464 = vld [vmem:[#allocation2 + $0x97] sm:$0x3]
        %v465 = vld [vmem:[#allocation2 + $0xa7] sm:$0xff]
        %v466 = vld [vmem:[#allocation2 + $0xaf] sm:$0xff]
        %v467 = vld [vmem:[#allocation2 + $0xb7] sm:$0x3]
        %v468 = vld [vmem:[#allocation2 + $0xc7] sm:$0xff]
        %v469 = vld [vmem:[#allocation2 + $0xcf] sm:$0xff]
        %v470 = vld [vmem:[#allocation2 + $0xd7] sm:$0x3]
        %v471 = vld [vmem:[#allocation2 + $0xe7] sm:$0xff]
        %v472 = vld [vmem:[#allocation2 + $0xef] sm:$0xff]
        %v473 = vld [vmem:[#allocation2 + $0xf7] sm:$0x3]
        %v474 = vld [vmem:[#allocation2 + $0x107] sm:$0xff]
        %v475 = vld [vmem:[#allocation2 + $0x10f] sm:$0xff]
        %v476 = vld [vmem:[#allocation2 + $0x117] sm:$0x3]
        %v477 = vld [vmem:[#allocation2 + $0x127] sm:$0xff]
        %v478 = vld [vmem:[#allocation2 + $0x12f] sm:$0xff]
        %v479 = vld [vmem:[#allocation2 + $0x137] sm:$0x3]
        %v480 = vld [vmem:[#allocation2 + $0x147] sm:$0xff]
        %v481 = vld [vmem:[#allocation2 + $0x14f] sm:$0xff]
        %v482 = vld [vmem:[#allocation2 + $0x157] sm:$0x3]
        %v483 = vld [vmem:[#allocation2 + $0x167] sm:$0xff]
        %v484 = vld [vmem:[#allocation2 + $0x16f] sm:$0xff]
        %v485 = vld [vmem:[#allocation2 + $0x177] sm:$0x3]
        %v486 = vld [vmem:[#allocation2 + $0x187] sm:$0xff]
        %v487 = vld [vmem:[#allocation2 + $0x18f] sm:$0xff]
        %v488 = vld [vmem:[#allocation2 + $0x197] sm:$0x3]
        %v489 = vld [vmem:[#allocation2 + $0x1a7] sm:$0xff]
        %v490 = vld [vmem:[#allocation2 + $0x1af] sm:$0xff]
        %v491 = vld [vmem:[#allocation2 + $0x1b7] sm:$0x3]
        %v492 = vld [vmem:[#allocation2 + $0x1c7] sm:$0xff]
        %v493 = vld [vmem:[#allocation2 + $0x1cf] sm:$0xff]
        %v494 = vld [vmem:[#allocation2 + $0x1d7] sm:$0x3]
        %v495 = vld [vmem:[#allocation2 + $0x1e7] sm:$0xff]
        %v496 = vld [vmem:[#allocation2 + $0x1ef] sm:$0xff]
        %v497 = vld [vmem:[#allocation2 + $0x1f7] sm:$0x3]
        %v498 = vld [vmem:[%s417 + $0x7] sm:$0xff]
        %v499 = vld [vmem:[%s417 + $0xf] sm:$0xff]
        %v500 = vld [vmem:[%s417 + $0x17] sm:$0x3]
        %v501 = vld [vmem:[%s417 + $0x27] sm:$0xff]
        %v502 = vld [vmem:[%s417 + $0x2f] sm:$0xff]
        %v503 = vld [vmem:[%s417 + $0x37] sm:$0x3]
        %v504 = vld [vmem:[%s417 + $0x47] sm:$0xff]
        %v505 = vld [vmem:[%s417 + $0x4f] sm:$0xff]
        %v506 = vld [vmem:[%s417 + $0x57] sm:$0x3]
        %v507 = vld [vmem:[%s417 + $0x67] sm:$0xff]
        %v508 = vld [vmem:[%s417 + $0x6f] sm:$0xff]
        %v509 = vld [vmem:[%s417 + $0x77] sm:$0x3]
        %v510 = vld [vmem:[%s417 + $0x87] sm:$0xff]
        %v511 = vld [vmem:[%s417 + $0x8f] sm:$0xff]
        %v512 = vld [vmem:[%s417 + $0x97] sm:$0x3]
        %v513 = vld [vmem:[%s417 + $0xa7] sm:$0xff]
        %v514 = vld [vmem:[%s417 + $0xaf] sm:$0xff]
        %v515 = vld [vmem:[%s417 + $0xb7] sm:$0x3]
        %v516 = vld [vmem:[%s417 + $0xc7] sm:$0xff]
        %v517 = vld [vmem:[%s417 + $0xcf] sm:$0xff]
        %v518 = vld [vmem:[%s417 + $0xd7] sm:$0x3]
        %v519 = vld [vmem:[%s417 + $0xe7] sm:$0xff]
        %v520 = vld [vmem:[%s417 + $0xef] sm:$0xff]
        %v521 = vld [vmem:[%s417 + $0xf7] sm:$0x3]
        %v522 = vld [vmem:[%s417 + $0x107] sm:$0xff]
        %v523 = vld [vmem:[%s417 + $0x10f] sm:$0xff]
        %v524 = vld [vmem:[%s417 + $0x117] sm:$0x3]
        %v525 = vld [vmem:[%s417 + $0x127] sm:$0xff]
        %v526 = vld [vmem:[%s417 + $0x12f] sm:$0xff]
        %v527 = vld [vmem:[%s417 + $0x137] sm:$0x3]
        %v528 = vld [vmem:[%s417 + $0x147] sm:$0xff]
        %v529 = vld [vmem:[%s417 + $0x14f] sm:$0xff]
        %v530 = vld [vmem:[%s417 + $0x157] sm:$0x3]
        %v531 = vld [vmem:[%s417 + $0x167] sm:$0xff]
        %v532 = vld [vmem:[%s417 + $0x16f] sm:$0xff]
        %v533 = vld [vmem:[%s417 + $0x177] sm:$0x3]
        %v534 = vld [vmem:[%s417 + $0x187] sm:$0xff]
        %v535 = vld [vmem:[%s417 + $0x18f] sm:$0xff]
        %v536 = vld [vmem:[%s417 + $0x197] sm:$0x3]
        %v537 = vld [vmem:[%s417 + $0x1a7] sm:$0xff]
        %v538 = vld [vmem:[%s417 + $0x1af] sm:$0xff]
        %v539 = vld [vmem:[%s417 + $0x1b7] sm:$0x3]
        %v540 = vld [vmem:[%s417 + $0x1c7] sm:$0xff]
        %v541 = vld [vmem:[%s417 + $0x1cf] sm:$0xff]
        %v542 = vld [vmem:[%s417 + $0x1d7] sm:$0x3]
        %v543 = vld [vmem:[%s417 + $0x1e7] sm:$0xff]
        %v544 = vld [vmem:[%s417 + $0x1ef] sm:$0xff]
        %v545 = vld [vmem:[%s417 + $0x1f7] sm:$0x3]
        %s546 = scalar_lea.vmem [#allocation2], 64
        %v547 = vld [vmem:[%s546 + $0x7] sm:$0xff]
        %v548 = vld [vmem:[%s546 + $0xf] sm:$0xff]
        %v549 = vld [vmem:[%s546 + $0x17] sm:$0x3]
        %v550 = vld [vmem:[%s546 + $0x27] sm:$0xff]
        %v551 = vld [vmem:[%s546 + $0x2f] sm:$0xff]
        %v552 = vld [vmem:[%s546 + $0x37] sm:$0x3]
        %v553 = vld [vmem:[%s546 + $0x47] sm:$0xff]
        %v554 = vld [vmem:[%s546 + $0x4f] sm:$0xff]
        %v555 = vld [vmem:[%s546 + $0x57] sm:$0x3]
        %v556 = vld [vmem:[%s546 + $0x67] sm:$0xff]
        %v557 = vld [vmem:[%s546 + $0x6f] sm:$0xff]
        %v558 = vld [vmem:[%s546 + $0x77] sm:$0x3]
        %v559 = vld [vmem:[%s546 + $0x87] sm:$0xff]
        %v560 = vld [vmem:[%s546 + $0x8f] sm:$0xff]
        %v561 = vld [vmem:[%s546 + $0x97] sm:$0x3]
        %v562 = vld [vmem:[%s546 + $0xa7] sm:$0xff]
        %v563 = vld [vmem:[%s546 + $0xaf] sm:$0xff]
        %v564 = vld [vmem:[%s546 + $0xb7] sm:$0x3]
        %v565 = vld [vmem:[%s546 + $0xc7] sm:$0xff]
        %v566 = vld [vmem:[%s546 + $0xcf] sm:$0xff]
        %v567 = vld [vmem:[%s546 + $0xd7] sm:$0x3]
        %v568 = vld [vmem:[%s546 + $0xe7] sm:$0xff]
        %v569 = vld [vmem:[%s546 + $0xef] sm:$0xff]
        %v570 = vld [vmem:[%s546 + $0xf7] sm:$0x3]
        %v571 = vld [vmem:[%s546 + $0x107] sm:$0xff]
        %v572 = vld [vmem:[%s546 + $0x10f] sm:$0xff]
        %v573 = vld [vmem:[%s546 + $0x117] sm:$0x3]
        %v574 = vld [vmem:[%s546 + $0x127] sm:$0xff]
        %v575 = vld [vmem:[%s546 + $0x12f] sm:$0xff]
        %v576 = vld [vmem:[%s546 + $0x137] sm:$0x3]
        %v577 = vld [vmem:[%s546 + $0x147] sm:$0xff]
        %v578 = vld [vmem:[%s546 + $0x14f] sm:$0xff]
        %v579 = vld [vmem:[%s546 + $0x157] sm:$0x3]
        %v580 = vld [vmem:[%s546 + $0x167] sm:$0xff]
        %v581 = vld [vmem:[%s546 + $0x16f] sm:$0xff]
        %v582 = vld [vmem:[%s546 + $0x177] sm:$0x3]
        %v583 = vld [vmem:[%s546 + $0x187] sm:$0xff]
        %v584 = vld [vmem:[%s546 + $0x18f] sm:$0xff]
        %v585 = vld [vmem:[%s546 + $0x197] sm:$0x3]
        %v586 = vld [vmem:[%s546 + $0x1a7] sm:$0xff]
        %v587 = vld [vmem:[%s546 + $0x1af] sm:$0xff]
        %v588 = vld [vmem:[%s546 + $0x1b7] sm:$0x3]
        %v589 = vld [vmem:[%s546 + $0x1c7] sm:$0xff]
        %v590 = vld [vmem:[%s546 + $0x1cf] sm:$0xff]
        %v591 = vld [vmem:[%s546 + $0x1d7] sm:$0x3]
        %v592 = vld [vmem:[%s546 + $0x1e7] sm:$0xff]
        %v593 = vld [vmem:[%s546 + $0x1ef] sm:$0xff]
        %v594 = vld [vmem:[%s546 + $0x1f7] sm:$0x3]
        %v595 = vmul.f32 %v498, 2.0
        %v596 = vmul.f32 %v499, 2.0
        %v597 = vmul.f32 %v500, 2.0
        %v598 = vmul.f32 %v501, 2.0
        %v599 = vmul.f32 %v502, 2.0
        %v600 = vmul.f32 %v503, 2.0
        %v601 = vmul.f32 %v504, 2.0
        %v602 = vmul.f32 %v505, 2.0
        %v603 = vmul.f32 %v506, 2.0
        %v604 = vmul.f32 %v507, 2.0
        %v605 = vmul.f32 %v508, 2.0
        %v606 = vmul.f32 %v509, 2.0
        %v607 = vmul.f32 %v510, 2.0
        %v608 = vmul.f32 %v511, 2.0
        %v609 = vmul.f32 %v512, 2.0
        %v610 = vmul.f32 %v513, 2.0
        %v611 = vmul.f32 %v514, 2.0
        %v612 = vmul.f32 %v515, 2.0
        %v613 = vmul.f32 %v516, 2.0
        %v614 = vmul.f32 %v517, 2.0
        %v615 = vmul.f32 %v518, 2.0
        %v616 = vmul.f32 %v519, 2.0
        %v617 = vmul.f32 %v520, 2.0
        %v618 = vmul.f32 %v521, 2.0
        %v619 = vmul.f32 %v522, 2.0
        %v620 = vmul.f32 %v523, 2.0
        %v621 = vmul.f32 %v524, 2.0
        %v622 = vmul.f32 %v525, 2.0
        %v623 = vmul.f32 %v526, 2.0
        %v624 = vmul.f32 %v527, 2.0
        %v625 = vmul.f32 %v528, 2.0
        %v626 = vmul.f32 %v529, 2.0
        %v627 = vmul.f32 %v530, 2.0
        %v628 = vmul.f32 %v531, 2.0
        %v629 = vmul.f32 %v532, 2.0
        %v630 = vmul.f32 %v533, 2.0
        %v631 = vmul.f32 %v534, 2.0
        %v632 = vmul.f32 %v535, 2.0
        %v633 = vmul.f32 %v536, 2.0
        %v634 = vmul.f32 %v537, 2.0
        %v635 = vmul.f32 %v538, 2.0
        %v636 = vmul.f32 %v539, 2.0
        %v637 = vmul.f32 %v540, 2.0
        %v638 = vmul.f32 %v541, 2.0
        %v639 = vmul.f32 %v542, 2.0
        %v640 = vmul.f32 %v543, 2.0
        %v641 = vmul.f32 %v544, 2.0
        %v642 = vmul.f32 %v545, 2.0
        %v643 = vadd.f32 %v450, %v595
        %v644 = vadd.f32 %v451, %v596
        %v645 = vadd.f32 %v452, %v597
        %v646 = vadd.f32 %v453, %v598
        %v647 = vadd.f32 %v454, %v599
        %v648 = vadd.f32 %v455, %v600
        %v649 = vadd.f32 %v456, %v601
        %v650 = vadd.f32 %v457, %v602
        %v651 = vadd.f32 %v458, %v603
        %v652 = vadd.f32 %v459, %v604
        %v653 = vadd.f32 %v460, %v605
        %v654 = vadd.f32 %v461, %v606
        %v655 = vadd.f32 %v462, %v607
        %v656 = vadd.f32 %v463, %v608
        %v657 = vadd.f32 %v464, %v609
        %v658 = vadd.f32 %v465, %v610
        %v659 = vadd.f32 %v466, %v611
        %v660 = vadd.f32 %v467, %v612
        %v661 = vadd.f32 %v468, %v613
        %v662 = vadd.f32 %v469, %v614
        %v663 = vadd.f32 %v470, %v615
        %v664 = vadd.f32 %v471, %v616
        %v665 = vadd.f32 %v472, %v617
        %v666 = vadd.f32 %v473, %v618
        %v667 = vadd.f32 %v474, %v619
        %v668 = vadd.f32 %v475, %v620
        %v669 = vadd.f32 %v476, %v621
        %v670 = vadd.f32 %v477, %v622
        %v671 = vadd.f32 %v478, %v623
        %v672 = vadd.f32 %v479, %v624
        %v673 = vadd.f32 %v480, %v625
        %v674 = vadd.f32 %v481, %v626
        %v675 = vadd.f32 %v482, %v627
        %v676 = vadd.f32 %v483, %v628
        %v677 = vadd.f32 %v484, %v629
        %v678 = vadd.f32 %v485, %v630
        %v679 = vadd.f32 %v486, %v631
        %v680 = vadd.f32 %v487, %v632
        %v681 = vadd.f32 %v488, %v633
        %v682 = vadd.f32 %v489, %v634
        %v683 = vadd.f32 %v490, %v635
        %v684 = vadd.f32 %v491, %v636
        %v685 = vadd.f32 %v492, %v637
        %v686 = vadd.f32 %v493, %v638
        %v687 = vadd.f32 %v494, %v639
        %v688 = vadd.f32 %v495, %v640
        %v689 = vadd.f32 %v496, %v641
        %v690 = vadd.f32 %v497, %v642
        %v691 = vadd.f32 %v643, %v547
        %v692 = vadd.f32 %v644, %v548
        %v693 = vadd.f32 %v645, %v549
        %v694 = vadd.f32 %v646, %v550
        %v695 = vadd.f32 %v647, %v551
        %v696 = vadd.f32 %v648, %v552
        %v697 = vadd.f32 %v649, %v553
        %v698 = vadd.f32 %v650, %v554
        %v699 = vadd.f32 %v651, %v555
        %v700 = vadd.f32 %v652, %v556
        %v701 = vadd.f32 %v653, %v557
        %v702 = vadd.f32 %v654, %v558
        %v703 = vadd.f32 %v655, %v559
        %v704 = vadd.f32 %v656, %v560
        %v705 = vadd.f32 %v657, %v561
        %v706 = vadd.f32 %v658, %v562
        %v707 = vadd.f32 %v659, %v563
        %v708 = vadd.f32 %v660, %v564
        %v709 = vadd.f32 %v661, %v565
        %v710 = vadd.f32 %v662, %v566
        %v711 = vadd.f32 %v663, %v567
        %v712 = vadd.f32 %v664, %v568
        %v713 = vadd.f32 %v665, %v569
        %v714 = vadd.f32 %v666, %v570
        %v715 = vadd.f32 %v667, %v571
        %v716 = vadd.f32 %v668, %v572
        %v717 = vadd.f32 %v669, %v573
        %v718 = vadd.f32 %v670, %v574
        %v719 = vadd.f32 %v671, %v575
        %v720 = vadd.f32 %v672, %v576
        %v721 = vadd.f32 %v673, %v577
        %v722 = vadd.f32 %v674, %v578
        %v723 = vadd.f32 %v675, %v579
        %v724 = vadd.f32 %v676, %v580
        %v725 = vadd.f32 %v677, %v581
        %v726 = vadd.f32 %v678, %v582
        %v727 = vadd.f32 %v679, %v583
        %v728 = vadd.f32 %v680, %v584
        %v729 = vadd.f32 %v681, %v585
        %v730 = vadd.f32 %v682, %v586
        %v731 = vadd.f32 %v683, %v587
        %v732 = vadd.f32 %v684, %v588
        %v733 = vadd.f32 %v685, %v589
        %v734 = vadd.f32 %v686, %v590
        %v735 = vadd.f32 %v687, %v591
        %v736 = vadd.f32 %v688, %v592
        %v737 = vadd.f32 %v689, %v593
        %v738 = vadd.f32 %v690, %v594
        %v739 = vsub.f32 %v547, %v450
        %v740 = vsub.f32 %v548, %v451
        %v741 = vsub.f32 %v549, %v452
        %v742 = vsub.f32 %v550, %v453
        %v743 = vsub.f32 %v551, %v454
        %v744 = vsub.f32 %v552, %v455
        %v745 = vsub.f32 %v553, %v456
        %v746 = vsub.f32 %v554, %v457
        %v747 = vsub.f32 %v555, %v458
        %v748 = vsub.f32 %v556, %v459
        %v749 = vsub.f32 %v557, %v460
        %v750 = vsub.f32 %v558, %v461
        %v751 = vsub.f32 %v559, %v462
        %v752 = vsub.f32 %v560, %v463
        %v753 = vsub.f32 %v561, %v464
        %v754 = vsub.f32 %v562, %v465
        %v755 = vsub.f32 %v563, %v466
        %v756 = vsub.f32 %v564, %v467
        %v757 = vsub.f32 %v565, %v468
        %v758 = vsub.f32 %v566, %v469
        %v759 = vsub.f32 %v567, %v470
        %v760 = vsub.f32 %v568, %v471
        %v761 = vsub.f32 %v569, %v472
        %v762 = vsub.f32 %v570, %v473
        %v763 = vsub.f32 %v571, %v474
        %v764 = vsub.f32 %v572, %v475
        %v765 = vsub.f32 %v573, %v476
        %v766 = vsub.f32 %v574, %v477
        %v767 = vsub.f32 %v575, %v478
        %v768 = vsub.f32 %v576, %v479
        %v769 = vsub.f32 %v577, %v480
        %v770 = vsub.f32 %v578, %v481
        %v771 = vsub.f32 %v579, %v482
        %v772 = vsub.f32 %v580, %v483
        %v773 = vsub.f32 %v581, %v484
        %v774 = vsub.f32 %v582, %v485
        %v775 = vsub.f32 %v583, %v486
        %v776 = vsub.f32 %v584, %v487
        %v777 = vsub.f32 %v585, %v488
        %v778 = vsub.f32 %v586, %v489
        %v779 = vsub.f32 %v587, %v490
        %v780 = vsub.f32 %v588, %v491
        %v781 = vsub.f32 %v589, %v492
        %v782 = vsub.f32 %v590, %v493
        %v783 = vsub.f32 %v591, %v494
        %v784 = vsub.f32 %v592, %v495
        %v785 = vsub.f32 %v593, %v496
        %v786 = vsub.f32 %v594, %v497
        %vm819 = vcmask 1041408
        %v820 = vrot.slane %v691, 6
        %v821 = vrot.slane %v692, 6
        %v822 = vsel %vm819, %v820, %v821
        %v823 = vrot.slane %v694, 6
        %v824 = vrot.slane %v695, 6
        %v825 = vsel %vm819, %v823, %v824
        %v826 = vrot.slane %v697, 6
        %v827 = vrot.slane %v698, 6
        %v828 = vsel %vm819, %v826, %v827
        %v829 = vrot.slane %v700, 6
        %v830 = vrot.slane %v701, 6
        %v831 = vsel %vm819, %v829, %v830
        %v832 = vrot.slane %v703, 6
        %v833 = vrot.slane %v704, 6
        %v834 = vsel %vm819, %v832, %v833
        %v835 = vrot.slane %v706, 6
        %v836 = vrot.slane %v707, 6
        %v837 = vsel %vm819, %v835, %v836
        %v838 = vrot.slane %v709, 6
        %v839 = vrot.slane %v710, 6
        %v840 = vsel %vm819, %v838, %v839
        %v841 = vrot.slane %v712, 6
        %v842 = vrot.slane %v713, 6
        %v843 = vsel %vm819, %v841, %v842
        %v844 = vrot.slane %v715, 6
        %v845 = vrot.slane %v716, 6
        %v846 = vsel %vm819, %v844, %v845
        %v847 = vrot.slane %v718, 6
        %v848 = vrot.slane %v719, 6
        %v849 = vsel %vm819, %v847, %v848
        %v850 = vrot.slane %v721, 6
        %v851 = vrot.slane %v722, 6
        %v852 = vsel %vm819, %v850, %v851
        %v853 = vrot.slane %v724, 6
        %v854 = vrot.slane %v725, 6
        %v855 = vsel %vm819, %v853, %v854
        %v856 = vrot.slane %v727, 6
        %v857 = vrot.slane %v728, 6
        %v858 = vsel %vm819, %v856, %v857
        %v859 = vrot.slane %v730, 6
        %v860 = vrot.slane %v731, 6
        %v861 = vsel %vm819, %v859, %v860
        %v862 = vrot.slane %v733, 6
        %v863 = vrot.slane %v734, 6
        %v864 = vsel %vm819, %v862, %v863
        %v865 = vrot.slane %v736, 6
        %v866 = vrot.slane %v737, 6
        %v867 = vsel %vm819, %v865, %v866
        %v916 = vsub.f32 %v691, %v820
        %v917 = vsub.f32 %v692, %v822
        %v918 = vsub.f32 %v693, %v821
        %v919 = vsub.f32 %v694, %v823
        %v920 = vsub.f32 %v695, %v825
        %v921 = vsub.f32 %v696, %v824
        %v922 = vsub.f32 %v697, %v826
        %v923 = vsub.f32 %v698, %v828
        %v924 = vsub.f32 %v699, %v827
        %v925 = vsub.f32 %v700, %v829
        %v926 = vsub.f32 %v701, %v831
        %v927 = vsub.f32 %v702, %v830
        %v928 = vsub.f32 %v703, %v832
        %v929 = vsub.f32 %v704, %v834
        %v930 = vsub.f32 %v705, %v833
        %v931 = vsub.f32 %v706, %v835
        %v932 = vsub.f32 %v707, %v837
        %v933 = vsub.f32 %v708, %v836
        %v934 = vsub.f32 %v709, %v838
        %v935 = vsub.f32 %v710, %v840
        %v936 = vsub.f32 %v711, %v839
        %v937 = vsub.f32 %v712, %v841
        %v938 = vsub.f32 %v713, %v843
        %v939 = vsub.f32 %v714, %v842
        %v940 = vsub.f32 %v715, %v844
        %v941 = vsub.f32 %v716, %v846
        %v942 = vsub.f32 %v717, %v845
        %v943 = vsub.f32 %v718, %v847
        %v944 = vsub.f32 %v719, %v849
        %v945 = vsub.f32 %v720, %v848
        %v946 = vsub.f32 %v721, %v850
        %v947 = vsub.f32 %v722, %v852
        %v948 = vsub.f32 %v723, %v851
        %v949 = vsub.f32 %v724, %v853
        %v950 = vsub.f32 %v725, %v855
        %v951 = vsub.f32 %v726, %v854
        %v952 = vsub.f32 %v727, %v856
        %v953 = vsub.f32 %v728, %v858
        %v954 = vsub.f32 %v729, %v857
        %v955 = vsub.f32 %v730, %v859
        %v956 = vsub.f32 %v731, %v861
        %v957 = vsub.f32 %v732, %v860
        %v958 = vsub.f32 %v733, %v862
        %v959 = vsub.f32 %v734, %v864
        %v960 = vsub.f32 %v735, %v863
        %v961 = vsub.f32 %v736, %v865
        %v962 = vsub.f32 %v737, %v867
        %v963 = vsub.f32 %v738, %v866
        %v964 = vmul.f32 %v739, 2.0
        %v965 = vmul.f32 %v740, 2.0
        %v966 = vmul.f32 %v741, 2.0
        %v967 = vmul.f32 %v742, 2.0
        %v968 = vmul.f32 %v743, 2.0
        %v969 = vmul.f32 %v744, 2.0
        %v970 = vmul.f32 %v745, 2.0
        %v971 = vmul.f32 %v746, 2.0
        %v972 = vmul.f32 %v747, 2.0
        %v973 = vmul.f32 %v748, 2.0
        %v974 = vmul.f32 %v749, 2.0
        %v975 = vmul.f32 %v750, 2.0
        %v976 = vmul.f32 %v751, 2.0
        %v977 = vmul.f32 %v752, 2.0
        %v978 = vmul.f32 %v753, 2.0
        %v979 = vmul.f32 %v754, 2.0
        %v980 = vmul.f32 %v755, 2.0
        %v981 = vmul.f32 %v756, 2.0
        %v982 = vmul.f32 %v757, 2.0
        %v983 = vmul.f32 %v758, 2.0
        %v984 = vmul.f32 %v759, 2.0
        %v985 = vmul.f32 %v760, 2.0
        %v986 = vmul.f32 %v761, 2.0
        %v987 = vmul.f32 %v762, 2.0
        %v988 = vmul.f32 %v763, 2.0
        %v989 = vmul.f32 %v764, 2.0
        %v990 = vmul.f32 %v765, 2.0
        %v991 = vmul.f32 %v766, 2.0
        %v992 = vmul.f32 %v767, 2.0
        %v993 = vmul.f32 %v768, 2.0
        %v994 = vmul.f32 %v769, 2.0
        %v995 = vmul.f32 %v770, 2.0
        %v996 = vmul.f32 %v771, 2.0
        %v997 = vmul.f32 %v772, 2.0
        %v998 = vmul.f32 %v773, 2.0
        %v999 = vmul.f32 %v774, 2.0
        %v1000 = vmul.f32 %v775, 2.0
        %v1001 = vmul.f32 %v776, 2.0
        %v1002 = vmul.f32 %v777, 2.0
        %v1003 = vmul.f32 %v778, 2.0
        %v1004 = vmul.f32 %v779, 2.0
        %v1005 = vmul.f32 %v780, 2.0
        %v1006 = vmul.f32 %v781, 2.0
        %v1007 = vmul.f32 %v782, 2.0
        %v1008 = vmul.f32 %v783, 2.0
        %v1009 = vmul.f32 %v784, 2.0
        %v1010 = vmul.f32 %v785, 2.0
        %v1011 = vmul.f32 %v786, 2.0
        %vm1060 = vcmask 1046528
        %v1061 = vrot.slane %v964, 1
        %v1062 = vrot.slane %v965, 1
        %v1063 = vsel %vm1060, %v1061, %v1062
        %v1064 = vrot.slane %v966, 1
        %v1065 = vsel %vm1060, %v1062, %v1064
        %v1066 = vrot.slane %v967, 1
        %v1067 = vrot.slane %v968, 1
        %v1068 = vsel %vm1060, %v1066, %v1067
        %v1069 = vrot.slane %v969, 1
        %v1070 = vsel %vm1060, %v1067, %v1069
        %v1071 = vrot.slane %v970, 1
        %v1072 = vrot.slane %v971, 1
        %v1073 = vsel %vm1060, %v1071, %v1072
        %v1074 = vrot.slane %v972, 1
        %v1075 = vsel %vm1060, %v1072, %v1074
        %v1076 = vrot.slane %v973, 1
        %v1077 = vrot.slane %v974, 1
        %v1078 = vsel %vm1060, %v1076, %v1077
        %v1079 = vrot.slane %v975, 1
        %v1080 = vsel %vm1060, %v1077, %v1079
        %v1081 = vrot.slane %v976, 1
        %v1082 = vrot.slane %v977, 1
        %v1083 = vsel %vm1060, %v1081, %v1082
        %v1084 = vrot.slane %v978, 1
        %v1085 = vsel %vm1060, %v1082, %v1084
        %v1086 = vrot.slane %v979, 1
        %v1087 = vrot.slane %v980, 1
        %v1088 = vsel %vm1060, %v1086, %v1087
        %v1089 = vrot.slane %v981, 1
        %v1090 = vsel %vm1060, %v1087, %v1089
        %v1091 = vrot.slane %v982, 1
        %v1092 = vrot.slane %v983, 1
        %v1093 = vsel %vm1060, %v1091, %v1092
        %v1094 = vrot.slane %v984, 1
        %v1095 = vsel %vm1060, %v1092, %v1094
        %v1096 = vrot.slane %v985, 1
        %v1097 = vrot.slane %v986, 1
        %v1098 = vsel %vm1060, %v1096, %v1097
        %v1099 = vrot.slane %v987, 1
        %v1100 = vsel %vm1060, %v1097, %v1099
        %v1101 = vrot.slane %v988, 1
        %v1102 = vrot.slane %v989, 1
        %v1103 = vsel %vm1060, %v1101, %v1102
        %v1104 = vrot.slane %v990, 1
        %v1105 = vsel %vm1060, %v1102, %v1104
        %v1106 = vrot.slane %v991, 1
        %v1107 = vrot.slane %v992, 1
        %v1108 = vsel %vm1060, %v1106, %v1107
        %v1109 = vrot.slane %v993, 1
        %v1110 = vsel %vm1060, %v1107, %v1109
        %v1111 = vrot.slane %v994, 1
        %v1112 = vrot.slane %v995, 1
        %v1113 = vsel %vm1060, %v1111, %v1112
        %v1114 = vrot.slane %v996, 1
        %v1115 = vsel %vm1060, %v1112, %v1114
        %v1116 = vrot.slane %v997, 1
        %v1117 = vrot.slane %v998, 1
        %v1118 = vsel %vm1060, %v1116, %v1117
        %v1119 = vrot.slane %v999, 1
        %v1120 = vsel %vm1060, %v1117, %v1119
        %v1121 = vrot.slane %v1000, 1
        %v1122 = vrot.slane %v1001, 1
        %v1123 = vsel %vm1060, %v1121, %v1122
        %v1124 = vrot.slane %v1002, 1
        %v1125 = vsel %vm1060, %v1122, %v1124
        %v1126 = vrot.slane %v1003, 1
        %v1127 = vrot.slane %v1004, 1
        %v1128 = vsel %vm1060, %v1126, %v1127
        %v1129 = vrot.slane %v1005, 1
        %v1130 = vsel %vm1060, %v1127, %v1129
        %v1131 = vrot.slane %v1006, 1
        %v1132 = vrot.slane %v1007, 1
        %v1133 = vsel %vm1060, %v1131, %v1132
        %v1134 = vrot.slane %v1008, 1
        %v1135 = vsel %vm1060, %v1132, %v1134
        %v1136 = vrot.slane %v1009, 1
        %v1137 = vrot.slane %v1010, 1
        %v1138 = vsel %vm1060, %v1136, %v1137
        %v1139 = vrot.slane %v1011, 1
        %v1140 = vsel %vm1060, %v1137, %v1139
        %v1173 = vadd.f32 %v739, %v1063
        %v1174 = vadd.f32 %v740, %v1065
        %v1175 = vadd.f32 %v742, %v1068
        %v1176 = vadd.f32 %v743, %v1070
        %v1177 = vadd.f32 %v745, %v1073
        %v1178 = vadd.f32 %v746, %v1075
        %v1179 = vadd.f32 %v748, %v1078
        %v1180 = vadd.f32 %v749, %v1080
        %v1181 = vadd.f32 %v751, %v1083
        %v1182 = vadd.f32 %v752, %v1085
        %v1183 = vadd.f32 %v754, %v1088
        %v1184 = vadd.f32 %v755, %v1090
        %v1185 = vadd.f32 %v757, %v1093
        %v1186 = vadd.f32 %v758, %v1095
        %v1187 = vadd.f32 %v760, %v1098
        %v1188 = vadd.f32 %v761, %v1100
        %v1189 = vadd.f32 %v763, %v1103
        %v1190 = vadd.f32 %v764, %v1105
        %v1191 = vadd.f32 %v766, %v1108
        %v1192 = vadd.f32 %v767, %v1110
        %v1193 = vadd.f32 %v769, %v1113
        %v1194 = vadd.f32 %v770, %v1115
        %v1195 = vadd.f32 %v772, %v1118
        %v1196 = vadd.f32 %v773, %v1120
        %v1197 = vadd.f32 %v775, %v1123
        %v1198 = vadd.f32 %v776, %v1125
        %v1199 = vadd.f32 %v778, %v1128
        %v1200 = vadd.f32 %v779, %v1130
        %v1201 = vadd.f32 %v781, %v1133
        %v1202 = vadd.f32 %v782, %v1135
        %v1203 = vadd.f32 %v784, %v1138
        %v1204 = vadd.f32 %v785, %v1140
        %vm1253 = vcmask 1045504
        %v1254 = vrot.slane %v739, 2
        %v1255 = vrot.slane %v740, 2
        %v1256 = vsel %vm1253, %v1254, %v1255
        %v1257 = vrot.slane %v741, 2
        %v1258 = vsel %vm1253, %v1255, %v1257
        %v1259 = vrot.slane %v742, 2
        %v1260 = vrot.slane %v743, 2
        %v1261 = vsel %vm1253, %v1259, %v1260
        %v1262 = vrot.slane %v744, 2
        %v1263 = vsel %vm1253, %v1260, %v1262
        %v1264 = vrot.slane %v745, 2
        %v1265 = vrot.slane %v746, 2
        %v1266 = vsel %vm1253, %v1264, %v1265
        %v1267 = vrot.slane %v747, 2
        %v1268 = vsel %vm1253, %v1265, %v1267
        %v1269 = vrot.slane %v748, 2
        %v1270 = vrot.slane %v749, 2
        %v1271 = vsel %vm1253, %v1269, %v1270
        %v1272 = vrot.slane %v750, 2
        %v1273 = vsel %vm1253, %v1270, %v1272
        %v1274 = vrot.slane %v751, 2
        %v1275 = vrot.slane %v752, 2
        %v1276 = vsel %vm1253, %v1274, %v1275
        %v1277 = vrot.slane %v753, 2
        %v1278 = vsel %vm1253, %v1275, %v1277
        %v1279 = vrot.slane %v754, 2
        %v1280 = vrot.slane %v755, 2
        %v1281 = vsel %vm1253, %v1279, %v1280
        %v1282 = vrot.slane %v756, 2
        %v1283 = vsel %vm1253, %v1280, %v1282
        %v1284 = vrot.slane %v757, 2
        %v1285 = vrot.slane %v758, 2
        %v1286 = vsel %vm1253, %v1284, %v1285
        %v1287 = vrot.slane %v759, 2
        %v1288 = vsel %vm1253, %v1285, %v1287
        %v1289 = vrot.slane %v760, 2
        %v1290 = vrot.slane %v761, 2
        %v1291 = vsel %vm1253, %v1289, %v1290
        %v1292 = vrot.slane %v762, 2
        %v1293 = vsel %vm1253, %v1290, %v1292
        %v1294 = vrot.slane %v763, 2
        %v1295 = vrot.slane %v764, 2
        %v1296 = vsel %vm1253, %v1294, %v1295
        %v1297 = vrot.slane %v765, 2
        %v1298 = vsel %vm1253, %v1295, %v1297
        %v1299 = vrot.slane %v766, 2
        %v1300 = vrot.slane %v767, 2
        %v1301 = vsel %vm1253, %v1299, %v1300
        %v1302 = vrot.slane %v768, 2
        %v1303 = vsel %vm1253, %v1300, %v1302
        %v1304 = vrot.slane %v769, 2
        %v1305 = vrot.slane %v770, 2
        %v1306 = vsel %vm1253, %v1304, %v1305
        %v1307 = vrot.slane %v771, 2
        %v1308 = vsel %vm1253, %v1305, %v1307
        %v1309 = vrot.slane %v772, 2
        %v1310 = vrot.slane %v773, 2
        %v1311 = vsel %vm1253, %v1309, %v1310
        %v1312 = vrot.slane %v774, 2
        %v1313 = vsel %vm1253, %v1310, %v1312
        %v1314 = vrot.slane %v775, 2
        %v1315 = vrot.slane %v776, 2
        %v1316 = vsel %vm1253, %v1314, %v1315
        %v1317 = vrot.slane %v777, 2
        %v1318 = vsel %vm1253, %v1315, %v1317
        %v1319 = vrot.slane %v778, 2
        %v1320 = vrot.slane %v779, 2
        %v1321 = vsel %vm1253, %v1319, %v1320
        %v1322 = vrot.slane %v780, 2
        %v1323 = vsel %vm1253, %v1320, %v1322
        %v1324 = vrot.slane %v781, 2
        %v1325 = vrot.slane %v782, 2
        %v1326 = vsel %vm1253, %v1324, %v1325
        %v1327 = vrot.slane %v783, 2
        %v1328 = vsel %vm1253, %v1325, %v1327
        %v1329 = vrot.slane %v784, 2
        %v1330 = vrot.slane %v785, 2
        %v1331 = vsel %vm1253, %v1329, %v1330
        %v1332 = vrot.slane %v786, 2
        %v1333 = vsel %vm1253, %v1330, %v1332
        %v1366 = vadd.f32 %v1173, %v1256
        %v1367 = vadd.f32 %v1174, %v1258
        %v1368 = vadd.f32 %v1175, %v1261
        %v1369 = vadd.f32 %v1176, %v1263
        %v1370 = vadd.f32 %v1177, %v1266
        %v1371 = vadd.f32 %v1178, %v1268
        %v1372 = vadd.f32 %v1179, %v1271
        %v1373 = vadd.f32 %v1180, %v1273
        %v1374 = vadd.f32 %v1181, %v1276
        %v1375 = vadd.f32 %v1182, %v1278
        %v1376 = vadd.f32 %v1183, %v1281
        %v1377 = vadd.f32 %v1184, %v1283
        %v1378 = vadd.f32 %v1185, %v1286
        %v1379 = vadd.f32 %v1186, %v1288
        %v1380 = vadd.f32 %v1187, %v1291
        %v1381 = vadd.f32 %v1188, %v1293
        %v1382 = vadd.f32 %v1189, %v1296
        %v1383 = vadd.f32 %v1190, %v1298
        %v1384 = vadd.f32 %v1191, %v1301
        %v1385 = vadd.f32 %v1192, %v1303
        %v1386 = vadd.f32 %v1193, %v1306
        %v1387 = vadd.f32 %v1194, %v1308
        %v1388 = vadd.f32 %v1195, %v1311
        %v1389 = vadd.f32 %v1196, %v1313
        %v1390 = vadd.f32 %v1197, %v1316
        %v1391 = vadd.f32 %v1198, %v1318
        %v1392 = vadd.f32 %v1199, %v1321
        %v1393 = vadd.f32 %v1200, %v1323
        %v1394 = vadd.f32 %v1201, %v1326
        %v1395 = vadd.f32 %v1202, %v1328
        %v1396 = vadd.f32 %v1203, %v1331
        %v1397 = vadd.f32 %v1204, %v1333
        %v1398 = vmul.f32 %v916, %v916
        %v1399 = vmul.f32 %v917, %v917
        %v1400 = vmul.f32 %v918, %v918
        %v1401 = vmul.f32 %v919, %v919
        %v1402 = vmul.f32 %v920, %v920
        %v1403 = vmul.f32 %v921, %v921
        %v1404 = vmul.f32 %v922, %v922
        %v1405 = vmul.f32 %v923, %v923
        %v1406 = vmul.f32 %v924, %v924
        %v1407 = vmul.f32 %v925, %v925
        %v1408 = vmul.f32 %v926, %v926
        %v1409 = vmul.f32 %v927, %v927
        %v1410 = vmul.f32 %v928, %v928
        %v1411 = vmul.f32 %v929, %v929
        %v1412 = vmul.f32 %v930, %v930
        %v1413 = vmul.f32 %v931, %v931
        %v1414 = vmul.f32 %v932, %v932
        %v1415 = vmul.f32 %v933, %v933
        %v1416 = vmul.f32 %v934, %v934
        %v1417 = vmul.f32 %v935, %v935
        %v1418 = vmul.f32 %v936, %v936
        %v1419 = vmul.f32 %v937, %v937
        %v1420 = vmul.f32 %v938, %v938
        %v1421 = vmul.f32 %v939, %v939
        %v1422 = vmul.f32 %v940, %v940
        %v1423 = vmul.f32 %v941, %v941
        %v1424 = vmul.f32 %v942, %v942
        %v1425 = vmul.f32 %v943, %v943
        %v1426 = vmul.f32 %v944, %v944
        %v1427 = vmul.f32 %v945, %v945
        %v1428 = vmul.f32 %v946, %v946
        %v1429 = vmul.f32 %v947, %v947
        %v1430 = vmul.f32 %v948, %v948
        %v1431 = vmul.f32 %v949, %v949
        %v1432 = vmul.f32 %v950, %v950
        %v1433 = vmul.f32 %v951, %v951
        %v1434 = vmul.f32 %v952, %v952
        %v1435 = vmul.f32 %v953, %v953
        %v1436 = vmul.f32 %v954, %v954
        %v1437 = vmul.f32 %v955, %v955
        %v1438 = vmul.f32 %v956, %v956
        %v1439 = vmul.f32 %v957, %v957
        %v1440 = vmul.f32 %v958, %v958
        %v1441 = vmul.f32 %v959, %v959
        %v1442 = vmul.f32 %v960, %v960
        %v1443 = vmul.f32 %v961, %v961
        %v1444 = vmul.f32 %v962, %v962
        %v1445 = vmul.f32 %v963, %v963
        %v1446 = vmul.f32 %v1366, %v1366
        %v1447 = vmul.f32 %v1367, %v1367
        %v1448 = vmul.f32 %v1368, %v1368
        %v1449 = vmul.f32 %v1369, %v1369
        %v1450 = vmul.f32 %v1370, %v1370
        %v1451 = vmul.f32 %v1371, %v1371
        %v1452 = vmul.f32 %v1372, %v1372
        %v1453 = vmul.f32 %v1373, %v1373
        %v1454 = vmul.f32 %v1374, %v1374
        %v1455 = vmul.f32 %v1375, %v1375
        %v1456 = vmul.f32 %v1376, %v1376
        %v1457 = vmul.f32 %v1377, %v1377
        %v1458 = vmul.f32 %v1378, %v1378
        %v1459 = vmul.f32 %v1379, %v1379
        %v1460 = vmul.f32 %v1380, %v1380
        %v1461 = vmul.f32 %v1381, %v1381
        %v1462 = vmul.f32 %v1382, %v1382
        %v1463 = vmul.f32 %v1383, %v1383
        %v1464 = vmul.f32 %v1384, %v1384
        %v1465 = vmul.f32 %v1385, %v1385
        %v1466 = vmul.f32 %v1386, %v1386
        %v1467 = vmul.f32 %v1387, %v1387
        %v1468 = vmul.f32 %v1388, %v1388
        %v1469 = vmul.f32 %v1389, %v1389
        %v1470 = vmul.f32 %v1390, %v1390
        %v1471 = vmul.f32 %v1391, %v1391
        %v1472 = vmul.f32 %v1392, %v1392
        %v1473 = vmul.f32 %v1393, %v1393
        %v1474 = vmul.f32 %v1394, %v1394
        %v1475 = vmul.f32 %v1395, %v1395
        %v1476 = vmul.f32 %v1396, %v1396
        %v1477 = vmul.f32 %v1397, %v1397
        %v1510 = vrot.slane %v1446, 6
        %v1511 = vrot.slane %v1447, 6
        %v1512 = vsel %vm819, %v1510, %v1511
        %v1513 = vrot.slane %v1448, 6
        %v1514 = vrot.slane %v1449, 6
        %v1515 = vsel %vm819, %v1513, %v1514
        %v1516 = vrot.slane %v1450, 6
        %v1517 = vrot.slane %v1451, 6
        %v1518 = vsel %vm819, %v1516, %v1517
        %v1519 = vrot.slane %v1452, 6
        %v1520 = vrot.slane %v1453, 6
        %v1521 = vsel %vm819, %v1519, %v1520
        %v1522 = vrot.slane %v1454, 6
        %v1523 = vrot.slane %v1455, 6
        %v1524 = vsel %vm819, %v1522, %v1523
        %v1525 = vrot.slane %v1456, 6
        %v1526 = vrot.slane %v1457, 6
        %v1527 = vsel %vm819, %v1525, %v1526
        %v1528 = vrot.slane %v1458, 6
        %v1529 = vrot.slane %v1459, 6
        %v1530 = vsel %vm819, %v1528, %v1529
        %v1531 = vrot.slane %v1460, 6
        %v1532 = vrot.slane %v1461, 6
        %v1533 = vsel %vm819, %v1531, %v1532
        %v1534 = vrot.slane %v1462, 6
        %v1535 = vrot.slane %v1463, 6
        %v1536 = vsel %vm819, %v1534, %v1535
        %v1537 = vrot.slane %v1464, 6
        %v1538 = vrot.slane %v1465, 6
        %v1539 = vsel %vm819, %v1537, %v1538
        %v1540 = vrot.slane %v1466, 6
        %v1541 = vrot.slane %v1467, 6
        %v1542 = vsel %vm819, %v1540, %v1541
        %v1543 = vrot.slane %v1468, 6
        %v1544 = vrot.slane %v1469, 6
        %v1545 = vsel %vm819, %v1543, %v1544
        %v1546 = vrot.slane %v1470, 6
        %v1547 = vrot.slane %v1471, 6
        %v1548 = vsel %vm819, %v1546, %v1547
        %v1549 = vrot.slane %v1472, 6
        %v1550 = vrot.slane %v1473, 6
        %v1551 = vsel %vm819, %v1549, %v1550
        %v1552 = vrot.slane %v1474, 6
        %v1553 = vrot.slane %v1475, 6
        %v1554 = vsel %vm819, %v1552, %v1553
        %v1555 = vrot.slane %v1476, 6
        %v1556 = vrot.slane %v1477, 6
        %v1557 = vsel %vm819, %v1555, %v1556
        %v1606 = vadd.f32 %v1398, %v1510
        %v1607 = vadd.f32 %v1399, %v1512
        %v1608 = vadd.f32 %v1400, %v1511
        %v1609 = vadd.f32 %v1401, %v1513
        %v1610 = vadd.f32 %v1402, %v1515
        %v1611 = vadd.f32 %v1403, %v1514
        %v1612 = vadd.f32 %v1404, %v1516
        %v1613 = vadd.f32 %v1405, %v1518
        %v1614 = vadd.f32 %v1406, %v1517
        %v1615 = vadd.f32 %v1407, %v1519
        %v1616 = vadd.f32 %v1408, %v1521
        %v1617 = vadd.f32 %v1409, %v1520
        %v1618 = vadd.f32 %v1410, %v1522
        %v1619 = vadd.f32 %v1411, %v1524
        %v1620 = vadd.f32 %v1412, %v1523
        %v1621 = vadd.f32 %v1413, %v1525
        %v1622 = vadd.f32 %v1414, %v1527
        %v1623 = vadd.f32 %v1415, %v1526
        %v1624 = vadd.f32 %v1416, %v1528
        %v1625 = vadd.f32 %v1417, %v1530
        %v1626 = vadd.f32 %v1418, %v1529
        %v1627 = vadd.f32 %v1419, %v1531
        %v1628 = vadd.f32 %v1420, %v1533
        %v1629 = vadd.f32 %v1421, %v1532
        %v1630 = vadd.f32 %v1422, %v1534
        %v1631 = vadd.f32 %v1423, %v1536
        %v1632 = vadd.f32 %v1424, %v1535
        %v1633 = vadd.f32 %v1425, %v1537
        %v1634 = vadd.f32 %v1426, %v1539
        %v1635 = vadd.f32 %v1427, %v1538
        %v1636 = vadd.f32 %v1428, %v1540
        %v1637 = vadd.f32 %v1429, %v1542
        %v1638 = vadd.f32 %v1430, %v1541
        %v1639 = vadd.f32 %v1431, %v1543
        %v1640 = vadd.f32 %v1432, %v1545
        %v1641 = vadd.f32 %v1433, %v1544
        %v1642 = vadd.f32 %v1434, %v1546
        %v1643 = vadd.f32 %v1435, %v1548
        %v1644 = vadd.f32 %v1436, %v1547
        %v1645 = vadd.f32 %v1437, %v1549
        %v1646 = vadd.f32 %v1438, %v1551
        %v1647 = vadd.f32 %v1439, %v1550
        %v1648 = vadd.f32 %v1440, %v1552
        %v1649 = vadd.f32 %v1441, %v1554
        %v1650 = vadd.f32 %v1442, %v1553
        %v1651 = vadd.f32 %v1443, %v1555
        %v1652 = vadd.f32 %v1444, %v1557
        %v1653 = vadd.f32 %v1445, %v1556
        %v1654 = vrsqrt.pop %v1606
        %v1655 = vmul.f32 %v1606, %v1654
        %vm1656 = vcmp.eq.f32.partialorder %v1606, inf
        %v1657 = vsel %vm1656, %v1606, %v1655
        %vm1658 = vcmp.eq.f32.partialorder %v1606, 0.0
        %v1659 = vand.u32 %v1606, 2147483648
        %v1660 = vsel %vm1658, %v1659, %v1657
        %v1661 = vrsqrt.pop %v1607
        %v1662 = vmul.f32 %v1607, %v1661
        %vm1663 = vcmp.eq.f32.partialorder %v1607, inf
        %v1664 = vsel %vm1663, %v1607, %v1662
        %vm1665 = vcmp.eq.f32.partialorder %v1607, 0.0
        %v1666 = vand.u32 %v1607, 2147483648
        %v1667 = vsel %vm1665, %v1666, %v1664
        %v1668 = vrsqrt.pop %v1608
        %v1669 = vmul.f32 %v1608, %v1668
        %vm1670 = vcmp.eq.f32.partialorder %v1608, inf
        %v1671 = vsel %vm1670, %v1608, %v1669
        %vm1672 = vcmp.eq.f32.partialorder %v1608, 0.0
        %v1673 = vand.u32 %v1608, 2147483648
        %v1674 = vsel %vm1672, %v1673, %v1671
        %v1675 = vrsqrt.pop %v1609
        %v1676 = vmul.f32 %v1609, %v1675
        %vm1677 = vcmp.eq.f32.partialorder %v1609, inf
        %v1678 = vsel %vm1677, %v1609, %v1676
        %vm1679 = vcmp.eq.f32.partialorder %v1609, 0.0
        %v1680 = vand.u32 %v1609, 2147483648
        %v1681 = vsel %vm1679, %v1680, %v1678
        %v1682 = vrsqrt.pop %v1610
        %v1683 = vmul.f32 %v1610, %v1682
        %vm1684 = vcmp.eq.f32.partialorder %v1610, inf
        %v1685 = vsel %vm1684, %v1610, %v1683
        %vm1686 = vcmp.eq.f32.partialorder %v1610, 0.0
        %v1687 = vand.u32 %v1610, 2147483648
        %v1688 = vsel %vm1686, %v1687, %v1685
        %v1689 = vrsqrt.pop %v1611
        %v1690 = vmul.f32 %v1611, %v1689
        %vm1691 = vcmp.eq.f32.partialorder %v1611, inf
        %v1692 = vsel %vm1691, %v1611, %v1690
        %vm1693 = vcmp.eq.f32.partialorder %v1611, 0.0
        %v1694 = vand.u32 %v1611, 2147483648
        %v1695 = vsel %vm1693, %v1694, %v1692
        %v1696 = vrsqrt.pop %v1612
        %v1697 = vmul.f32 %v1612, %v1696
        %vm1698 = vcmp.eq.f32.partialorder %v1612, inf
        %v1699 = vsel %vm1698, %v1612, %v1697
        %vm1700 = vcmp.eq.f32.partialorder %v1612, 0.0
        %v1701 = vand.u32 %v1612, 2147483648
        %v1702 = vsel %vm1700, %v1701, %v1699
        %v1703 = vrsqrt.pop %v1613
        %v1704 = vmul.f32 %v1613, %v1703
        %vm1705 = vcmp.eq.f32.partialorder %v1613, inf
        %v1706 = vsel %vm1705, %v1613, %v1704
        %vm1707 = vcmp.eq.f32.partialorder %v1613, 0.0
        %v1708 = vand.u32 %v1613, 2147483648
        %v1709 = vsel %vm1707, %v1708, %v1706
        %v1710 = vrsqrt.pop %v1614
        %v1711 = vmul.f32 %v1614, %v1710
        %vm1712 = vcmp.eq.f32.partialorder %v1614, inf
        %v1713 = vsel %vm1712, %v1614, %v1711
        %vm1714 = vcmp.eq.f32.partialorder %v1614, 0.0
        %v1715 = vand.u32 %v1614, 2147483648
        %v1716 = vsel %vm1714, %v1715, %v1713
        %v1717 = vrsqrt.pop %v1615
        %v1718 = vmul.f32 %v1615, %v1717
        %vm1719 = vcmp.eq.f32.partialorder %v1615, inf
        %v1720 = vsel %vm1719, %v1615, %v1718
        %vm1721 = vcmp.eq.f32.partialorder %v1615, 0.0
        %v1722 = vand.u32 %v1615, 2147483648
        %v1723 = vsel %vm1721, %v1722, %v1720
        %v1724 = vrsqrt.pop %v1616
        %v1725 = vmul.f32 %v1616, %v1724
        %vm1726 = vcmp.eq.f32.partialorder %v1616, inf
        %v1727 = vsel %vm1726, %v1616, %v1725
        %vm1728 = vcmp.eq.f32.partialorder %v1616, 0.0
        %v1729 = vand.u32 %v1616, 2147483648
        %v1730 = vsel %vm1728, %v1729, %v1727
        %v1731 = vrsqrt.pop %v1617
        %v1732 = vmul.f32 %v1617, %v1731
        %vm1733 = vcmp.eq.f32.partialorder %v1617, inf
        %v1734 = vsel %vm1733, %v1617, %v1732
        %vm1735 = vcmp.eq.f32.partialorder %v1617, 0.0
        %v1736 = vand.u32 %v1617, 2147483648
        %v1737 = vsel %vm1735, %v1736, %v1734
        %v1738 = vrsqrt.pop %v1618
        %v1739 = vmul.f32 %v1618, %v1738
        %vm1740 = vcmp.eq.f32.partialorder %v1618, inf
        %v1741 = vsel %vm1740, %v1618, %v1739
        %vm1742 = vcmp.eq.f32.partialorder %v1618, 0.0
        %v1743 = vand.u32 %v1618, 2147483648
        %v1744 = vsel %vm1742, %v1743, %v1741
        %v1745 = vrsqrt.pop %v1619
        %v1746 = vmul.f32 %v1619, %v1745
        %vm1747 = vcmp.eq.f32.partialorder %v1619, inf
        %v1748 = vsel %vm1747, %v1619, %v1746
        %vm1749 = vcmp.eq.f32.partialorder %v1619, 0.0
        %v1750 = vand.u32 %v1619, 2147483648
        %v1751 = vsel %vm1749, %v1750, %v1748
        %v1752 = vrsqrt.pop %v1620
        %v1753 = vmul.f32 %v1620, %v1752
        %vm1754 = vcmp.eq.f32.partialorder %v1620, inf
        %v1755 = vsel %vm1754, %v1620, %v1753
        %vm1756 = vcmp.eq.f32.partialorder %v1620, 0.0
        %v1757 = vand.u32 %v1620, 2147483648
        %v1758 = vsel %vm1756, %v1757, %v1755
        %v1759 = vrsqrt.pop %v1621
        %v1760 = vmul.f32 %v1621, %v1759
        %vm1761 = vcmp.eq.f32.partialorder %v1621, inf
        %v1762 = vsel %vm1761, %v1621, %v1760
        %vm1763 = vcmp.eq.f32.partialorder %v1621, 0.0
        %v1764 = vand.u32 %v1621, 2147483648
        %v1765 = vsel %vm1763, %v1764, %v1762
        %v1766 = vrsqrt.pop %v1622
        %v1767 = vmul.f32 %v1622, %v1766
        %vm1768 = vcmp.eq.f32.partialorder %v1622, inf
        %v1769 = vsel %vm1768, %v1622, %v1767
        %vm1770 = vcmp.eq.f32.partialorder %v1622, 0.0
        %v1771 = vand.u32 %v1622, 2147483648
        %v1772 = vsel %vm1770, %v1771, %v1769
        %v1773 = vrsqrt.pop %v1623
        %v1774 = vmul.f32 %v1623, %v1773
        %vm1775 = vcmp.eq.f32.partialorder %v1623, inf
        %v1776 = vsel %vm1775, %v1623, %v1774
        %vm1777 = vcmp.eq.f32.partialorder %v1623, 0.0
        %v1778 = vand.u32 %v1623, 2147483648
        %v1779 = vsel %vm1777, %v1778, %v1776
        %v1780 = vrsqrt.pop %v1624
        %v1781 = vmul.f32 %v1624, %v1780
        %vm1782 = vcmp.eq.f32.partialorder %v1624, inf
        %v1783 = vsel %vm1782, %v1624, %v1781
        %vm1784 = vcmp.eq.f32.partialorder %v1624, 0.0
        %v1785 = vand.u32 %v1624, 2147483648
        %v1786 = vsel %vm1784, %v1785, %v1783
        %v1787 = vrsqrt.pop %v1625
        %v1788 = vmul.f32 %v1625, %v1787
        %vm1789 = vcmp.eq.f32.partialorder %v1625, inf
        %v1790 = vsel %vm1789, %v1625, %v1788
        %vm1791 = vcmp.eq.f32.partialorder %v1625, 0.0
        %v1792 = vand.u32 %v1625, 2147483648
        %v1793 = vsel %vm1791, %v1792, %v1790
        %v1794 = vrsqrt.pop %v1626
        %v1795 = vmul.f32 %v1626, %v1794
        %vm1796 = vcmp.eq.f32.partialorder %v1626, inf
        %v1797 = vsel %vm1796, %v1626, %v1795
        %vm1798 = vcmp.eq.f32.partialorder %v1626, 0.0
        %v1799 = vand.u32 %v1626, 2147483648
        %v1800 = vsel %vm1798, %v1799, %v1797
        %v1801 = vrsqrt.pop %v1627
        %v1802 = vmul.f32 %v1627, %v1801
        %vm1803 = vcmp.eq.f32.partialorder %v1627, inf
        %v1804 = vsel %vm1803, %v1627, %v1802
        %vm1805 = vcmp.eq.f32.partialorder %v1627, 0.0
        %v1806 = vand.u32 %v1627, 2147483648
        %v1807 = vsel %vm1805, %v1806, %v1804
        %v1808 = vrsqrt.pop %v1628
        %v1809 = vmul.f32 %v1628, %v1808
        %vm1810 = vcmp.eq.f32.partialorder %v1628, inf
        %v1811 = vsel %vm1810, %v1628, %v1809
        %vm1812 = vcmp.eq.f32.partialorder %v1628, 0.0
        %v1813 = vand.u32 %v1628, 2147483648
        %v1814 = vsel %vm1812, %v1813, %v1811
        %v1815 = vrsqrt.pop %v1629
        %v1816 = vmul.f32 %v1629, %v1815
        %vm1817 = vcmp.eq.f32.partialorder %v1629, inf
        %v1818 = vsel %vm1817, %v1629, %v1816
        %vm1819 = vcmp.eq.f32.partialorder %v1629, 0.0
        %v1820 = vand.u32 %v1629, 2147483648
        %v1821 = vsel %vm1819, %v1820, %v1818
        %v1822 = vrsqrt.pop %v1630
        %v1823 = vmul.f32 %v1630, %v1822
        %vm1824 = vcmp.eq.f32.partialorder %v1630, inf
        %v1825 = vsel %vm1824, %v1630, %v1823
        %vm1826 = vcmp.eq.f32.partialorder %v1630, 0.0
        %v1827 = vand.u32 %v1630, 2147483648
        %v1828 = vsel %vm1826, %v1827, %v1825
        %v1829 = vrsqrt.pop %v1631
        %v1830 = vmul.f32 %v1631, %v1829
        %vm1831 = vcmp.eq.f32.partialorder %v1631, inf
        %v1832 = vsel %vm1831, %v1631, %v1830
        %vm1833 = vcmp.eq.f32.partialorder %v1631, 0.0
        %v1834 = vand.u32 %v1631, 2147483648
        %v1835 = vsel %vm1833, %v1834, %v1832
        %v1836 = vrsqrt.pop %v1632
        %v1837 = vmul.f32 %v1632, %v1836
        %vm1838 = vcmp.eq.f32.partialorder %v1632, inf
        %v1839 = vsel %vm1838, %v1632, %v1837
        %vm1840 = vcmp.eq.f32.partialorder %v1632, 0.0
        %v1841 = vand.u32 %v1632, 2147483648
        %v1842 = vsel %vm1840, %v1841, %v1839
        %v1843 = vrsqrt.pop %v1633
        %v1844 = vmul.f32 %v1633, %v1843
        %vm1845 = vcmp.eq.f32.partialorder %v1633, inf
        %v1846 = vsel %vm1845, %v1633, %v1844
        %vm1847 = vcmp.eq.f32.partialorder %v1633, 0.0
        %v1848 = vand.u32 %v1633, 2147483648
        %v1849 = vsel %vm1847, %v1848, %v1846
        %v1850 = vrsqrt.pop %v1634
        %v1851 = vmul.f32 %v1634, %v1850
        %vm1852 = vcmp.eq.f32.partialorder %v1634, inf
        %v1853 = vsel %vm1852, %v1634, %v1851
        %vm1854 = vcmp.eq.f32.partialorder %v1634, 0.0
        %v1855 = vand.u32 %v1634, 2147483648
        %v1856 = vsel %vm1854, %v1855, %v1853
        %v1857 = vrsqrt.pop %v1635
        %v1858 = vmul.f32 %v1635, %v1857
        %vm1859 = vcmp.eq.f32.partialorder %v1635, inf
        %v1860 = vsel %vm1859, %v1635, %v1858
        %vm1861 = vcmp.eq.f32.partialorder %v1635, 0.0
        %v1862 = vand.u32 %v1635, 2147483648
        %v1863 = vsel %vm1861, %v1862, %v1860
        %v1864 = vrsqrt.pop %v1636
        %v1865 = vmul.f32 %v1636, %v1864
        %vm1866 = vcmp.eq.f32.partialorder %v1636, inf
        %v1867 = vsel %vm1866, %v1636, %v1865
        %vm1868 = vcmp.eq.f32.partialorder %v1636, 0.0
        %v1869 = vand.u32 %v1636, 2147483648
        %v1870 = vsel %vm1868, %v1869, %v1867
        %v1871 = vrsqrt.pop %v1637
        %v1872 = vmul.f32 %v1637, %v1871
        %vm1873 = vcmp.eq.f32.partialorder %v1637, inf
        %v1874 = vsel %vm1873, %v1637, %v1872
        %vm1875 = vcmp.eq.f32.partialorder %v1637, 0.0
        %v1876 = vand.u32 %v1637, 2147483648
        %v1877 = vsel %vm1875, %v1876, %v1874
        %v1878 = vrsqrt.pop %v1638
        %v1879 = vmul.f32 %v1638, %v1878
        %vm1880 = vcmp.eq.f32.partialorder %v1638, inf
        %v1881 = vsel %vm1880, %v1638, %v1879
        %vm1882 = vcmp.eq.f32.partialorder %v1638, 0.0
        %v1883 = vand.u32 %v1638, 2147483648
        %v1884 = vsel %vm1882, %v1883, %v1881
        %v1885 = vrsqrt.pop %v1639
        %v1886 = vmul.f32 %v1639, %v1885
        %vm1887 = vcmp.eq.f32.partialorder %v1639, inf
        %v1888 = vsel %vm1887, %v1639, %v1886
        %vm1889 = vcmp.eq.f32.partialorder %v1639, 0.0
        %v1890 = vand.u32 %v1639, 2147483648
        %v1891 = vsel %vm1889, %v1890, %v1888
        %v1892 = vrsqrt.pop %v1640
        %v1893 = vmul.f32 %v1640, %v1892
        %vm1894 = vcmp.eq.f32.partialorder %v1640, inf
        %v1895 = vsel %vm1894, %v1640, %v1893
        %vm1896 = vcmp.eq.f32.partialorder %v1640, 0.0
        %v1897 = vand.u32 %v1640, 2147483648
        %v1898 = vsel %vm1896, %v1897, %v1895
        %v1899 = vrsqrt.pop %v1641
        %v1900 = vmul.f32 %v1641, %v1899
        %vm1901 = vcmp.eq.f32.partialorder %v1641, inf
        %v1902 = vsel %vm1901, %v1641, %v1900
        %vm1903 = vcmp.eq.f32.partialorder %v1641, 0.0
        %v1904 = vand.u32 %v1641, 2147483648
        %v1905 = vsel %vm1903, %v1904, %v1902
        %v1906 = vrsqrt.pop %v1642
        %v1907 = vmul.f32 %v1642, %v1906
        %vm1908 = vcmp.eq.f32.partialorder %v1642, inf
        %v1909 = vsel %vm1908, %v1642, %v1907
        %vm1910 = vcmp.eq.f32.partialorder %v1642, 0.0
        %v1911 = vand.u32 %v1642, 2147483648
        %v1912 = vsel %vm1910, %v1911, %v1909
        %v1913 = vrsqrt.pop %v1643
        %v1914 = vmul.f32 %v1643, %v1913
        %vm1915 = vcmp.eq.f32.partialorder %v1643, inf
        %v1916 = vsel %vm1915, %v1643, %v1914
        %vm1917 = vcmp.eq.f32.partialorder %v1643, 0.0
        %v1918 = vand.u32 %v1643, 2147483648
        %v1919 = vsel %vm1917, %v1918, %v1916
        %v1920 = vrsqrt.pop %v1644
        %v1921 = vmul.f32 %v1644, %v1920
        %vm1922 = vcmp.eq.f32.partialorder %v1644, inf
        %v1923 = vsel %vm1922, %v1644, %v1921
        %vm1924 = vcmp.eq.f32.partialorder %v1644, 0.0
        %v1925 = vand.u32 %v1644, 2147483648
        %v1926 = vsel %vm1924, %v1925, %v1923
        %v1927 = vrsqrt.pop %v1645
        %v1928 = vmul.f32 %v1645, %v1927
        %vm1929 = vcmp.eq.f32.partialorder %v1645, inf
        %v1930 = vsel %vm1929, %v1645, %v1928
        %vm1931 = vcmp.eq.f32.partialorder %v1645, 0.0
        %v1932 = vand.u32 %v1645, 2147483648
        %v1933 = vsel %vm1931, %v1932, %v1930
        %v1934 = vrsqrt.pop %v1646
        %v1935 = vmul.f32 %v1646, %v1934
        %vm1936 = vcmp.eq.f32.partialorder %v1646, inf
        %v1937 = vsel %vm1936, %v1646, %v1935
        %vm1938 = vcmp.eq.f32.partialorder %v1646, 0.0
        %v1939 = vand.u32 %v1646, 2147483648
        %v1940 = vsel %vm1938, %v1939, %v1937
        %v1941 = vrsqrt.pop %v1647
        %v1942 = vmul.f32 %v1647, %v1941
        %vm1943 = vcmp.eq.f32.partialorder %v1647, inf
        %v1944 = vsel %vm1943, %v1647, %v1942
        %vm1945 = vcmp.eq.f32.partialorder %v1647, 0.0
        %v1946 = vand.u32 %v1647, 2147483648
        %v1947 = vsel %vm1945, %v1946, %v1944
        %v1948 = vrsqrt.pop %v1648
        %v1949 = vmul.f32 %v1648, %v1948
        %vm1950 = vcmp.eq.f32.partialorder %v1648, inf
        %v1951 = vsel %vm1950, %v1648, %v1949
        %vm1952 = vcmp.eq.f32.partialorder %v1648, 0.0
        %v1953 = vand.u32 %v1648, 2147483648
        %v1954 = vsel %vm1952, %v1953, %v1951
        %v1955 = vrsqrt.pop %v1649
        %v1956 = vmul.f32 %v1649, %v1955
        %vm1957 = vcmp.eq.f32.partialorder %v1649, inf
        %v1958 = vsel %vm1957, %v1649, %v1956
        %vm1959 = vcmp.eq.f32.partialorder %v1649, 0.0
        %v1960 = vand.u32 %v1649, 2147483648
        %v1961 = vsel %vm1959, %v1960, %v1958
        %v1962 = vrsqrt.pop %v1650
        %v1963 = vmul.f32 %v1650, %v1962
        %vm1964 = vcmp.eq.f32.partialorder %v1650, inf
        %v1965 = vsel %vm1964, %v1650, %v1963
        %vm1966 = vcmp.eq.f32.partialorder %v1650, 0.0
        %v1967 = vand.u32 %v1650, 2147483648
        %v1968 = vsel %vm1966, %v1967, %v1965
        %v1969 = vrsqrt.pop %v1651
        %v1970 = vmul.f32 %v1651, %v1969
        %vm1971 = vcmp.eq.f32.partialorder %v1651, inf
        %v1972 = vsel %vm1971, %v1651, %v1970
        %vm1973 = vcmp.eq.f32.partialorder %v1651, 0.0
        %v1974 = vand.u32 %v1651, 2147483648
        %v1975 = vsel %vm1973, %v1974, %v1972
        %v1976 = vrsqrt.pop %v1652
        %v1977 = vmul.f32 %v1652, %v1976
        %vm1978 = vcmp.eq.f32.partialorder %v1652, inf
        %v1979 = vsel %vm1978, %v1652, %v1977
        %vm1980 = vcmp.eq.f32.partialorder %v1652, 0.0
        %v1981 = vand.u32 %v1652, 2147483648
        %v1982 = vsel %vm1980, %v1981, %v1979
        %v1983 = vrsqrt.pop %v1653
        %v1984 = vmul.f32 %v1653, %v1983
        %vm1985 = vcmp.eq.f32.partialorder %v1653, inf
        %v1986 = vsel %vm1985, %v1653, %v1984
        %vm1987 = vcmp.eq.f32.partialorder %v1653, 0.0
        %v1988 = vand.u32 %v1653, 2147483648
        %v1989 = vsel %vm1987, %v1988, %v1986
        %vm1990 = vcmask 261122
        %v1991 = vsel %vm1990, %v1660, 0.0
        %1992 = vadd.xlane.f32.xlu0 %v1991
        %v1993 = vpop.xlane.xlu0 %1992
        %v1994 = vsel %vm327, %v1667, 0.0
        %1995 = vadd.xlane.f32.xlu0 %v1994
        %v1996 = vpop.xlane.xlu0 %1995
        %vm1997 = vcmask 254976
        %v1998 = vsel %vm1997, %v1674, 0.0
        %1999 = vadd.xlane.f32.xlu0 %v1998
        %v2000 = vpop.xlane.xlu0 %1999
        %v2001 = vsel %vm1990, %v1681, 0.0
        %2002 = vadd.xlane.f32.xlu0 %v2001
        %v2003 = vpop.xlane.xlu0 %2002
        %v2004 = vsel %vm327, %v1688, 0.0
        %2005 = vadd.xlane.f32.xlu0 %v2004
        %v2006 = vpop.xlane.xlu0 %2005
        %v2007 = vsel %vm1997, %v1695, 0.0
        %2008 = vadd.xlane.f32.xlu0 %v2007
        %v2009 = vpop.xlane.xlu0 %2008
        %v2010 = vsel %vm1990, %v1702, 0.0
        %2011 = vadd.xlane.f32.xlu0 %v2010
        %v2012 = vpop.xlane.xlu0 %2011
        %v2013 = vsel %vm327, %v1709, 0.0
        %2014 = vadd.xlane.f32.xlu0 %v2013
        %v2015 = vpop.xlane.xlu0 %2014
        %v2016 = vsel %vm1997, %v1716, 0.0
        %2017 = vadd.xlane.f32.xlu0 %v2016
        %v2018 = vpop.xlane.xlu0 %2017
        %v2019 = vsel %vm1990, %v1723, 0.0
        %2020 = vadd.xlane.f32.xlu0 %v2019
        %v2021 = vpop.xlane.xlu0 %2020
        %v2022 = vsel %vm327, %v1730, 0.0
        %2023 = vadd.xlane.f32.xlu0 %v2022
        %v2024 = vpop.xlane.xlu0 %2023
        %v2025 = vsel %vm1997, %v1737, 0.0
        %2026 = vadd.xlane.f32.xlu0 %v2025
        %v2027 = vpop.xlane.xlu0 %2026
        %v2028 = vsel %vm1990, %v1744, 0.0
        %2029 = vadd.xlane.f32.xlu0 %v2028
        %v2030 = vpop.xlane.xlu0 %2029
        %v2031 = vsel %vm327, %v1751, 0.0
        %2032 = vadd.xlane.f32.xlu0 %v2031
        %v2033 = vpop.xlane.xlu0 %2032
        %v2034 = vsel %vm1997, %v1758, 0.0
        %2035 = vadd.xlane.f32.xlu0 %v2034
        %v2036 = vpop.xlane.xlu0 %2035
        %v2037 = vsel %vm1990, %v1765, 0.0
        %2038 = vadd.xlane.f32.xlu0 %v2037
        %v2039 = vpop.xlane.xlu0 %2038
        %v2040 = vsel %vm327, %v1772, 0.0
        %2041 = vadd.xlane.f32.xlu0 %v2040
        %v2042 = vpop.xlane.xlu0 %2041
        %v2043 = vsel %vm1997, %v1779, 0.0
        %2044 = vadd.xlane.f32.xlu0 %v2043
        %v2045 = vpop.xlane.xlu0 %2044
        %v2046 = vsel %vm1990, %v1786, 0.0
        %2047 = vadd.xlane.f32.xlu0 %v2046
        %v2048 = vpop.xlane.xlu0 %2047
        %v2049 = vsel %vm327, %v1793, 0.0
        %2050 = vadd.xlane.f32.xlu0 %v2049
        %v2051 = vpop.xlane.xlu0 %2050
        %v2052 = vsel %vm1997, %v1800, 0.0
        %2053 = vadd.xlane.f32.xlu0 %v2052
        %v2054 = vpop.xlane.xlu0 %2053
        %v2055 = vsel %vm1990, %v1807, 0.0
        %2056 = vadd.xlane.f32.xlu0 %v2055
        %v2057 = vpop.xlane.xlu0 %2056
        %v2058 = vsel %vm327, %v1814, 0.0
        %2059 = vadd.xlane.f32.xlu0 %v2058
        %v2060 = vpop.xlane.xlu0 %2059
        %v2061 = vsel %vm1997, %v1821, 0.0
        %2062 = vadd.xlane.f32.xlu0 %v2061
        %v2063 = vpop.xlane.xlu0 %2062
        %v2064 = vsel %vm1990, %v1828, 0.0
        %2065 = vadd.xlane.f32.xlu0 %v2064
        %v2066 = vpop.xlane.xlu0 %2065
        %v2067 = vsel %vm327, %v1835, 0.0
        %2068 = vadd.xlane.f32.xlu0 %v2067
        %v2069 = vpop.xlane.xlu0 %2068
        %v2070 = vsel %vm1997, %v1842, 0.0
        %2071 = vadd.xlane.f32.xlu0 %v2070
        %v2072 = vpop.xlane.xlu0 %2071
        %v2073 = vsel %vm1990, %v1849, 0.0
        %2074 = vadd.xlane.f32.xlu0 %v2073
        %v2075 = vpop.xlane.xlu0 %2074
        %v2076 = vsel %vm327, %v1856, 0.0
        %2077 = vadd.xlane.f32.xlu0 %v2076
        %v2078 = vpop.xlane.xlu0 %2077
        %v2079 = vsel %vm1997, %v1863, 0.0
        %2080 = vadd.xlane.f32.xlu0 %v2079
        %v2081 = vpop.xlane.xlu0 %2080
        %v2082 = vsel %vm1990, %v1870, 0.0
        %2083 = vadd.xlane.f32.xlu0 %v2082
        %v2084 = vpop.xlane.xlu0 %2083
        %v2085 = vsel %vm327, %v1877, 0.0
        %2086 = vadd.xlane.f32.xlu0 %v2085
        %v2087 = vpop.xlane.xlu0 %2086
        %v2088 = vsel %vm1997, %v1884, 0.0
        %2089 = vadd.xlane.f32.xlu0 %v2088
        %v2090 = vpop.xlane.xlu0 %2089
        %v2091 = vsel %vm1990, %v1891, 0.0
        %2092 = vadd.xlane.f32.xlu0 %v2091
        %v2093 = vpop.xlane.xlu0 %2092
        %v2094 = vsel %vm327, %v1898, 0.0
        %2095 = vadd.xlane.f32.xlu0 %v2094
        %v2096 = vpop.xlane.xlu0 %2095
        %v2097 = vsel %vm1997, %v1905, 0.0
        %2098 = vadd.xlane.f32.xlu0 %v2097
        %v2099 = vpop.xlane.xlu0 %2098
        %v2100 = vsel %vm1990, %v1912, 0.0
        %2101 = vadd.xlane.f32.xlu0 %v2100
        %v2102 = vpop.xlane.xlu0 %2101
        %v2103 = vsel %vm327, %v1919, 0.0
        %2104 = vadd.xlane.f32.xlu0 %v2103
        %v2105 = vpop.xlane.xlu0 %2104
        %v2106 = vsel %vm1997, %v1926, 0.0
        %2107 = vadd.xlane.f32.xlu0 %v2106
        %v2108 = vpop.xlane.xlu0 %2107
        %v2109 = vsel %vm1990, %v1933, 0.0
        %2110 = vadd.xlane.f32.xlu0 %v2109
        %v2111 = vpop.xlane.xlu0 %2110
        %v2112 = vsel %vm327, %v1940, 0.0
        %2113 = vadd.xlane.f32.xlu0 %v2112
        %v2114 = vpop.xlane.xlu0 %2113
        %v2115 = vsel %vm1997, %v1947, 0.0
        %2116 = vadd.xlane.f32.xlu0 %v2115
        %v2117 = vpop.xlane.xlu0 %2116
        %v2118 = vsel %vm1990, %v1954, 0.0
        %2119 = vadd.xlane.f32.xlu0 %v2118
        %v2120 = vpop.xlane.xlu0 %2119
        %v2121 = vsel %vm327, %v1961, 0.0
        %2122 = vadd.xlane.f32.xlu0 %v2121
        %v2123 = vpop.xlane.xlu0 %2122
        %v2124 = vsel %vm1997, %v1968, 0.0
        %2125 = vadd.xlane.f32.xlu0 %v2124
        %v2126 = vpop.xlane.xlu0 %2125
        %v2127 = vsel %vm1990, %v1975, 0.0
        %2128 = vadd.xlane.f32.xlu0 %v2127
        %v2129 = vpop.xlane.xlu0 %2128
        %v2130 = vsel %vm327, %v1982, 0.0
        %2131 = vadd.xlane.f32.xlu0 %v2130
        %v2132 = vpop.xlane.xlu0 %2131
        %v2133 = vsel %vm1997, %v1989, 0.0
        %2134 = vadd.xlane.f32.xlu0 %v2133
        %v2135 = vpop.xlane.xlu0 %2134
        %v2136 = vrcp.pop 32.0
        %v2137 = vmul.f32 %v1993, %v2136
        %v2138 = vmul.f32 %v1996, %v2136
        %v2139 = vmul.f32 %v2000, %v2136
        %v2140 = vmul.f32 %v2003, %v2136
        %v2141 = vmul.f32 %v2006, %v2136
        %v2142 = vmul.f32 %v2009, %v2136
        %v2143 = vmul.f32 %v2012, %v2136
        %v2144 = vmul.f32 %v2015, %v2136
        %v2145 = vmul.f32 %v2018, %v2136
        %v2146 = vmul.f32 %v2021, %v2136
        %v2147 = vmul.f32 %v2024, %v2136
        %v2148 = vmul.f32 %v2027, %v2136
        %v2149 = vmul.f32 %v2030, %v2136
        %v2150 = vmul.f32 %v2033, %v2136
        %v2151 = vmul.f32 %v2036, %v2136
        %v2152 = vmul.f32 %v2039, %v2136
        %v2153 = vmul.f32 %v2042, %v2136
        %v2154 = vmul.f32 %v2045, %v2136
        %v2155 = vmul.f32 %v2048, %v2136
        %v2156 = vmul.f32 %v2051, %v2136
        %v2157 = vmul.f32 %v2054, %v2136
        %v2158 = vmul.f32 %v2057, %v2136
        %v2159 = vmul.f32 %v2060, %v2136
        %v2160 = vmul.f32 %v2063, %v2136
        %v2161 = vmul.f32 %v2066, %v2136
        %v2162 = vmul.f32 %v2069, %v2136
        %v2163 = vmul.f32 %v2072, %v2136
        %v2164 = vmul.f32 %v2075, %v2136
        %v2165 = vmul.f32 %v2078, %v2136
        %v2166 = vmul.f32 %v2081, %v2136
        %v2167 = vmul.f32 %v2084, %v2136
        %v2168 = vmul.f32 %v2087, %v2136
        %v2169 = vmul.f32 %v2090, %v2136
        %v2170 = vmul.f32 %v2093, %v2136
        %v2171 = vmul.f32 %v2096, %v2136
        %v2172 = vmul.f32 %v2099, %v2136
        %v2173 = vmul.f32 %v2102, %v2136
        %v2174 = vmul.f32 %v2105, %v2136
        %v2175 = vmul.f32 %v2108, %v2136
        %v2176 = vmul.f32 %v2111, %v2136
        %v2177 = vmul.f32 %v2114, %v2136
        %v2178 = vmul.f32 %v2117, %v2136
        %v2179 = vmul.f32 %v2120, %v2136
        %v2180 = vmul.f32 %v2123, %v2136
        %v2181 = vmul.f32 %v2126, %v2136
        %v2182 = vmul.f32 %v2129, %v2136
        %v2183 = vmul.f32 %v2132, %v2136
        %v2184 = vmul.f32 %v2135, %v2136
        %v2233 = vlaneseq
        %v2234 = vand.u32 %v2233, 127
        %v2235 = vadd.s32 %v2234, 2
        %v2236 = vlaneseq
        %v2237 = vshrl.u32 %v2236, 7
        %v2238 = vsub.s32 %v2235, %v2237
        %v2239 = vrot.slane %v2137, %v2238
        %v2240 = vadd.s32 %v2234, 4294967290
        %v2241 = vlaneseq
        %v2242 = vshrl.u32 %v2241, 7
        %v2243 = vsub.s32 %v2240, %v2242
        %v2244 = vrot.slane %v2138, %v2243
        %vm2245 = vcmask 113712
        %v2246 = vsel %vm2245, %v2244, %v2239
        %v2247 = vadd.s32 %v2234, 4294967282
        %v2248 = vlaneseq
        %v2249 = vshrl.u32 %v2248, 7
        %v2250 = vsub.s32 %v2247, %v2249
        %v2251 = vrot.slane %v2139, %v2250
        %vm2252 = vcmask 179312
        %v2253 = vsel %vm2252, %v2251, %v2246
        %v2254 = vlaneseq
        %v2255 = vshrl.u32 %v2254, 7
        %v2256 = vsub.s32 %v2235, %v2255
        %v2257 = vrot.slane %v2140, %v2256
        %v2258 = vlaneseq
        %v2259 = vshrl.u32 %v2258, 7
        %v2260 = vsub.s32 %v2240, %v2259
        %v2261 = vrot.slane %v2141, %v2260
        %v2262 = vsel %vm2245, %v2261, %v2257
        %v2263 = vlaneseq
        %v2264 = vshrl.u32 %v2263, 7
        %v2265 = vsub.s32 %v2247, %v2264
        %v2266 = vrot.slane %v2142, %v2265
        %v2267 = vsel %vm2252, %v2266, %v2262
        %v2268 = vlaneseq
        %v2269 = vshrl.u32 %v2268, 7
        %v2270 = vsub.s32 %v2235, %v2269
        %v2271 = vrot.slane %v2143, %v2270
        %v2272 = vlaneseq
        %v2273 = vshrl.u32 %v2272, 7
        %v2274 = vsub.s32 %v2240, %v2273
        %v2275 = vrot.slane %v2144, %v2274
        %v2276 = vsel %vm2245, %v2275, %v2271
        %v2277 = vlaneseq
        %v2278 = vshrl.u32 %v2277, 7
        %v2279 = vsub.s32 %v2247, %v2278
        %v2280 = vrot.slane %v2145, %v2279
        %v2281 = vsel %vm2252, %v2280, %v2276
        %v2282 = vlaneseq
        %v2283 = vshrl.u32 %v2282, 7
        %v2284 = vsub.s32 %v2235, %v2283
        %v2285 = vrot.slane %v2146, %v2284
        %v2286 = vlaneseq
        %v2287 = vshrl.u32 %v2286, 7
        %v2288 = vsub.s32 %v2240, %v2287
        %v2289 = vrot.slane %v2147, %v2288
        %v2290 = vsel %vm2245, %v2289, %v2285
        %v2291 = vlaneseq
        %v2292 = vshrl.u32 %v2291, 7
        %v2293 = vsub.s32 %v2247, %v2292
        %v2294 = vrot.slane %v2148, %v2293
        %v2295 = vsel %vm2252, %v2294, %v2290
        %v2296 = vlaneseq
        %v2297 = vshrl.u32 %v2296, 7
        %v2298 = vsub.s32 %v2235, %v2297
        %v2299 = vrot.slane %v2149, %v2298
        %v2300 = vlaneseq
        %v2301 = vshrl.u32 %v2300, 7
        %v2302 = vsub.s32 %v2240, %v2301
        %v2303 = vrot.slane %v2150, %v2302
        %v2304 = vsel %vm2245, %v2303, %v2299
        %v2305 = vlaneseq
        %v2306 = vshrl.u32 %v2305, 7
        %v2307 = vsub.s32 %v2247, %v2306
        %v2308 = vrot.slane %v2151, %v2307
        %v2309 = vsel %vm2252, %v2308, %v2304
        %v2310 = vlaneseq
        %v2311 = vshrl.u32 %v2310, 7
        %v2312 = vsub.s32 %v2235, %v2311
        %v2313 = vrot.slane %v2152, %v2312
        %v2314 = vlaneseq
        %v2315 = vshrl.u32 %v2314, 7
        %v2316 = vsub.s32 %v2240, %v2315
        %v2317 = vrot.slane %v2153, %v2316
        %v2318 = vsel %vm2245, %v2317, %v2313
        %v2319 = vlaneseq
        %v2320 = vshrl.u32 %v2319, 7
        %v2321 = vsub.s32 %v2247, %v2320
        %v2322 = vrot.slane %v2154, %v2321
        %v2323 = vsel %vm2252, %v2322, %v2318
        %v2324 = vlaneseq
        %v2325 = vshrl.u32 %v2324, 7
        %v2326 = vsub.s32 %v2235, %v2325
        %v2327 = vrot.slane %v2155, %v2326
        %v2328 = vlaneseq
        %v2329 = vshrl.u32 %v2328, 7
        %v2330 = vsub.s32 %v2240, %v2329
        %v2331 = vrot.slane %v2156, %v2330
        %v2332 = vsel %vm2245, %v2331, %v2327
        %v2333 = vlaneseq
        %v2334 = vshrl.u32 %v2333, 7
        %v2335 = vsub.s32 %v2247, %v2334
        %v2336 = vrot.slane %v2157, %v2335
        %v2337 = vsel %vm2252, %v2336, %v2332
        %v2338 = vlaneseq
        %v2339 = vshrl.u32 %v2338, 7
        %v2340 = vsub.s32 %v2235, %v2339
        %v2341 = vrot.slane %v2158, %v2340
        %v2342 = vlaneseq
        %v2343 = vshrl.u32 %v2342, 7
        %v2344 = vsub.s32 %v2240, %v2343
        %v2345 = vrot.slane %v2159, %v2344
        %v2346 = vsel %vm2245, %v2345, %v2341
        %v2347 = vlaneseq
        %v2348 = vshrl.u32 %v2347, 7
        %v2349 = vsub.s32 %v2247, %v2348
        %v2350 = vrot.slane %v2160, %v2349
        %v2351 = vsel %vm2252, %v2350, %v2346
        %v2352 = vlaneseq
        %v2353 = vshrl.u32 %v2352, 7
        %v2354 = vsub.s32 %v2235, %v2353
        %v2355 = vrot.slane %v2161, %v2354
        %v2356 = vlaneseq
        %v2357 = vshrl.u32 %v2356, 7
        %v2358 = vsub.s32 %v2240, %v2357
        %v2359 = vrot.slane %v2162, %v2358
        %v2360 = vsel %vm2245, %v2359, %v2355
        %v2361 = vlaneseq
        %v2362 = vshrl.u32 %v2361, 7
        %v2363 = vsub.s32 %v2247, %v2362
        %v2364 = vrot.slane %v2163, %v2363
        %v2365 = vsel %vm2252, %v2364, %v2360
        %v2366 = vlaneseq
        %v2367 = vshrl.u32 %v2366, 7
        %v2368 = vsub.s32 %v2235, %v2367
        %v2369 = vrot.slane %v2164, %v2368
        %v2370 = vlaneseq
        %v2371 = vshrl.u32 %v2370, 7
        %v2372 = vsub.s32 %v2240, %v2371
        %v2373 = vrot.slane %v2165, %v2372
        %v2374 = vsel %vm2245, %v2373, %v2369
        %v2375 = vlaneseq
        %v2376 = vshrl.u32 %v2375, 7
        %v2377 = vsub.s32 %v2247, %v2376
        %v2378 = vrot.slane %v2166, %v2377
        %v2379 = vsel %vm2252, %v2378, %v2374
        %v2380 = vlaneseq
        %v2381 = vshrl.u32 %v2380, 7
        %v2382 = vsub.s32 %v2235, %v2381
        %v2383 = vrot.slane %v2167, %v2382
        %v2384 = vlaneseq
        %v2385 = vshrl.u32 %v2384, 7
        %v2386 = vsub.s32 %v2240, %v2385
        %v2387 = vrot.slane %v2168, %v2386
        %v2388 = vsel %vm2245, %v2387, %v2383
        %v2389 = vlaneseq
        %v2390 = vshrl.u32 %v2389, 7
        %v2391 = vsub.s32 %v2247, %v2390
        %v2392 = vrot.slane %v2169, %v2391
        %v2393 = vsel %vm2252, %v2392, %v2388
        %v2394 = vlaneseq
        %v2395 = vshrl.u32 %v2394, 7
        %v2396 = vsub.s32 %v2235, %v2395
        %v2397 = vrot.slane %v2170, %v2396
        %v2398 = vlaneseq
        %v2399 = vshrl.u32 %v2398, 7
        %v2400 = vsub.s32 %v2240, %v2399
        %v2401 = vrot.slane %v2171, %v2400
        %v2402 = vsel %vm2245, %v2401, %v2397
        %v2403 = vlaneseq
        %v2404 = vshrl.u32 %v2403, 7
        %v2405 = vsub.s32 %v2247, %v2404
        %v2406 = vrot.slane %v2172, %v2405
        %v2407 = vsel %vm2252, %v2406, %v2402
        %v2408 = vlaneseq
        %v2409 = vshrl.u32 %v2408, 7
        %v2410 = vsub.s32 %v2235, %v2409
        %v2411 = vrot.slane %v2173, %v2410
        %v2412 = vlaneseq
        %v2413 = vshrl.u32 %v2412, 7
        %v2414 = vsub.s32 %v2240, %v2413
        %v2415 = vrot.slane %v2174, %v2414
        %v2416 = vsel %vm2245, %v2415, %v2411
        %v2417 = vlaneseq
        %v2418 = vshrl.u32 %v2417, 7
        %v2419 = vsub.s32 %v2247, %v2418
        %v2420 = vrot.slane %v2175, %v2419
        %v2421 = vsel %vm2252, %v2420, %v2416
        %v2422 = vlaneseq
        %v2423 = vshrl.u32 %v2422, 7
        %v2424 = vsub.s32 %v2235, %v2423
        %v2425 = vrot.slane %v2176, %v2424
        %v2426 = vlaneseq
        %v2427 = vshrl.u32 %v2426, 7
        %v2428 = vsub.s32 %v2240, %v2427
        %v2429 = vrot.slane %v2177, %v2428
        %v2430 = vsel %vm2245, %v2429, %v2425
        %v2431 = vlaneseq
        %v2432 = vshrl.u32 %v2431, 7
        %v2433 = vsub.s32 %v2247, %v2432
        %v2434 = vrot.slane %v2178, %v2433
        %v2435 = vsel %vm2252, %v2434, %v2430
        %v2436 = vlaneseq
        %v2437 = vshrl.u32 %v2436, 7
        %v2438 = vsub.s32 %v2235, %v2437
        %v2439 = vrot.slane %v2179, %v2438
        %v2440 = vlaneseq
        %v2441 = vshrl.u32 %v2440, 7
        %v2442 = vsub.s32 %v2240, %v2441
        %v2443 = vrot.slane %v2180, %v2442
        %v2444 = vsel %vm2245, %v2443, %v2439
        %v2445 = vlaneseq
        %v2446 = vshrl.u32 %v2445, 7
        %v2447 = vsub.s32 %v2247, %v2446
        %v2448 = vrot.slane %v2181, %v2447
        %v2449 = vsel %vm2252, %v2448, %v2444
        %v2450 = vlaneseq
        %v2451 = vshrl.u32 %v2450, 7
        %v2452 = vsub.s32 %v2235, %v2451
        %v2453 = vrot.slane %v2182, %v2452
        %v2454 = vlaneseq
        %v2455 = vshrl.u32 %v2454, 7
        %v2456 = vsub.s32 %v2240, %v2455
        %v2457 = vrot.slane %v2183, %v2456
        %v2458 = vsel %vm2245, %v2457, %v2453
        %v2459 = vlaneseq
        %v2460 = vshrl.u32 %v2459, 7
        %v2461 = vsub.s32 %v2247, %v2460
        %v2462 = vrot.slane %v2184, %v2461
        %v2463 = vsel %vm2252, %v2462, %v2458
        %vm2464 = vcmask 1043459
        %v2465 = vsel %vm2464, %v2267, %v2253
        %vm2466 = vcmask 1044484
        %v2467 = vsel %vm2466, %v2281, %v2465
        %vm2468 = vcmask 1045509
        %v2469 = vsel %vm2468, %v2295, %v2467
        %vm2470 = vcmask 1046534
        %v2471 = vsel %vm2470, %v2309, %v2469
        %vm2472 = vcmask 1047559
        %v2473 = vsel %vm2472, %v2323, %v2471
        %vm2474 = vcmask 1041409
        %v2475 = vsel %vm2474, %v2351, %v2337
        %vm2476 = vcmask 1042434
        %v2477 = vsel %vm2476, %v2365, %v2475
        %v2478 = vsel %vm2464, %v2379, %v2477
        %v2479 = vsel %vm2466, %v2393, %v2478
        %v2480 = vsel %vm2468, %v2407, %v2479
        %v2481 = vsel %vm2470, %v2421, %v2480
        %v2482 = vsel %vm2472, %v2435, %v2481
        %v2483 = vsel %vm2474, %v2463, %v2449
        %vm2487 = vcmask 130050
        %2488 = vst.msk [vmem:[%s316 - $0x2] sm:$0xfc] %vm2487, %v2473
        %vm2489 = vcmask 130048
        %2490 = vst.msk [vmem:[%s316 + $0x6] sm:$0xff] %vm2489, %v2482
        %vm2491 = vcmask 123904
        %2492 = vst.msk [vmem:[%s316 + $0xe] sm:$0x3] %vm2491, %v2483
        %s2493 = sand.u32 %s145, 1
        %s2494 = scalar_lea.sflag [#allocation5], %s2493
        %s2495 = sand.u32 %s145, 1
        %s2496 = smul.addr %s2495, 16
        %s2497 = scalar_lea.vmem [#allocation9], %s2496
        // Predicated region
        $region53: #{tpu_custom_call.1} parent=31 // pred_check
          %p2498 = pneg %p155
        $region54: #{tpu_custom_call.1} parent=31 // pred_check_branch
          %2500 = sbr.rel (%p2498) target = $region56
        $region55: #{tpu_custom_call.1} parent=31 // pred_region
          %s2501 = smul.u32 2, %s28
          %s2503 = ssub.s32 256, 256
          %2504 = vsyncadd %s2494, %s2503
          %s2505 = smul.addr %s27, 2
          %s2506 = sadd.s32 %s2501, %s2505
          %s2507 = smul.addr %s2506, 128
          %s2508 = scalar_lea.hbm %s3, %s2507
          %s2509 = sshll.u32 %s2497, 4
          %s2510 = int_to_ptr.vmem [resolvable:$true] %s2509
          %2515 = dma.vmem_to_hbm [thread:$0]  %s2510, 256, %s2508, %s2494, 128, 128, 8
        $region56: #{tpu_custom_call.1} parent=31 // pred_fallthru
          _
      $region32: #{tpu_custom_call.1} parent=5 // pred_fallthru
        _
      %p2516 = scmp.le.s32.totalorder 2, %s18
      // Predicated region
      $region57: #{tpu_custom_call.1} parent=5 // pred_check
        %p2517 = pneg %p2516
      $region58: #{tpu_custom_call.1} parent=5 // pred_check_branch
        %2519 = sbr.rel (%p2517) target = $region60
      $region59: #{tpu_custom_call.1} parent=5 // pred_region
        %s2520 = ssub.s32 %s18, 2
        // Predicated region
        $region61: #{tpu_custom_call.1} parent=59 // pred_check
          %p2521 = pneg %p161
        $region62: #{tpu_custom_call.1} parent=59 // pred_check_branch
          %2523 = sbr.rel (%p2521) target = $region64
        $region63: #{tpu_custom_call.1} parent=59 // pred_region
          %s2524 = sand.u32 %s146, 1
          %s2525 = scalar_lea.sflag [#allocation5], %s2524
          %s2526 = sand.u32 %s146, 1
          %s2527 = smul.addr %s2526, 16
          %s2528 = scalar_lea.vmem [#allocation9], %s2527
          %2529 = dma.done %s2525, 256
        $region64: #{tpu_custom_call.1} parent=59 // pred_fallthru
          _
      $region60: #{tpu_custom_call.1} parent=5 // pred_fallthru
        _
    $region6: #{tpu_custom_call.1} parent=1 // loop_footer
      %s22 = sadd.s32 1, %s18
    $region7: #{tpu_custom_call.1} parent=1 // loop_footer_branch
      %17 = sbr.rel target = $region3
    $region8: #{tpu_custom_call.1} parent=1 // loop_exit
      _
    %2530 = vsyncpa [#allocation4], 1
    %s2531 = scalar_lea.sflag [#allocation4], 1
    %2532 = vsyncpa %s2531, 1
    %2533 = vsyncpa [#allocation7], 1
    %s2534 = scalar_lea.sflag [#allocation7], 1
    %2535 = vsyncpa %s2534, 1
    %2536 = vsyncpa [#allocation5], 1
    %s2537 = scalar_lea.sflag [#allocation5], 1
    %2538 = vsyncpa %s2537, 1

</llo_original>
